<compile_context>
chip_gen: v7x
topology: tpu7x:2x2x1
jax: 0.10.0
libtpu: 0.0.40
codegen_flags: <defaults>
</compile_context>

<pallas_src>
import functools

import jax
import jax.numpy as jnp
from jax.experimental import pallas as pl
from jax.experimental.pallas import tpu as pltpu


def _spatial_attention_kernel(w_ref, x_ref, o_ref, sum_ref, max_ref, feat_ref,
                              *, n_chan, ksize, pad, height, width):
    # w_ref   : SMEM (2*K*K,) f32          flattened conv weight [c, ky, kx]
    # x_ref   : VMEM (1, block_c, H, W)    current (batch, channel-tile) block
    # o_ref   : VMEM (1, 1, H, W)          sigmoid(conv(cat(avg, max)))
    # sum_ref : VMEM (H, W) f32 scratch    running channel sum
    # max_ref : VMEM (H, W) f32 scratch    running channel max
    # feat_ref: VMEM (2, H+2p, W+2p) f32   zero-padded [avg; max] maps
    c_step = pl.program_id(1)
    n_steps = pl.num_programs(1)

    xv = x_ref[0].astype(jnp.float32)                 # (block_c, H, W)
    # Reductions over the leading (non-tiled) axis: pure VPU elementwise
    # adds/maxes across vregs -- no XLU cross-lane traffic.
    part_sum = jnp.sum(xv, axis=0)                    # (H, W)
    part_max = jnp.max(xv, axis=0)                    # (H, W)

    @pl.when(c_step == 0)
    def _init():
        sum_ref[...] = jnp.zeros((height, width), jnp.float32)
        max_ref[...] = jnp.full((height, width), -jnp.inf, jnp.float32)

    sum_ref[...] = sum_ref[...] + part_sum
    max_ref[...] = jnp.maximum(max_ref[...], part_max)

    @pl.when(c_step == n_steps - 1)
    def _finalize():
        # Zero-padded (2, H+2p, W+2p) feature stack: channel 0 = mean, 1 = max.
        # Padded scratch is tiny; zero + two interior writes once per batch.
        feat_ref[...] = jnp.zeros(
            (2, height + 2 * pad, width + 2 * pad), jnp.float32)
        feat_ref[0, pl.ds(pad, height), pl.ds(pad, width)] = (
            sum_ref[...] * (1.0 / n_chan))
        feat_ref[1, pl.ds(pad, height), pl.ds(pad, width)] = max_ref[...]

        # KxK conv (2 -> 1 channel, no bias) as an unrolled shift-accumulate.
        # 2*K*K (= 98 for K=7) VPU multiply-adds on (H, W) tiles -- negligible
        # next to the C*(H, W) channel-reduction pass over x.
        acc = jnp.zeros((height, width), jnp.float32)
        for c in range(2):
            for ky in range(ksize):
                for kx in range(ksize):
                    wt = w_ref[c * ksize * ksize + ky * ksize + kx]
                    acc = acc + wt * feat_ref[c, pl.ds(ky, height),
                                              pl.ds(kx, width)]

        # sigmoid -> EUP slot
        o_ref[0, 0] = jax.nn.sigmoid(acc).astype(o_ref.dtype)


def spatial_attention(x, w, *, block_c=None):
    """x: (N, C, H, W); w: (1, 2, K, K) Conv2d weight (no bias).

    Returns sigmoid(conv2d(cat([mean_c(x), max_c(x)], 1), w)) of shape
    (N, 1, H, W), matching the PyTorch module output.
    """
    N, C, H, W = x.shape
    K = w.shape[-1]
    pad = K // 2

    # Channel tiling from a VMEM byte budget so the double-buffered input
    # block stays well inside scoped VMEM (v7x has only 64 MiB total).
    if block_c is None:
        itemsize = jnp.dtype(x.dtype).itemsize
        budget_bytes = 4 * 1024 * 1024          # per input block (x2 buffers)
        max_bc = max(1, budget_bytes // (H * W * itemsize))
        max_bc = int(min(max_bc, 512, C))
        block_c = next(d for d in range(max_bc, 0, -1) if C % d == 0)
    assert C % block_c == 0
    n_c_steps = C // block_c

    w_flat = jnp.asarray(w, jnp.float32).reshape(2 * K * K)

    kernel = functools.partial(
        _spatial_attention_kernel,
        n_chan=C, ksize=K, pad=pad, height=H, width=W)

    out = pl.pallas_call(
        kernel,
        out_shape=jax.ShapeDtypeStruct((N, 1, H, W), x.dtype),
        grid_spec=pltpu.PrefetchScalarGridSpec(
            num_scalar_prefetch=0,
            grid=(N, n_c_steps),
            in_specs=[
                # tiny conv weight: resident in SMEM, never re-DMA'd per step
                pl.BlockSpec(memory_space=pltpu.MemorySpace.SMEM),
                # native NCHW block: no wrapper transpose, single HBM pass
                pl.BlockSpec((1, block_c, H, W), lambda b, c: (b, c, 0, 0)),
            ],
            out_specs=pl.BlockSpec((1, 1, H, W), lambda b, c: (b, 0, 0, 0)),
            scratch_shapes=[
                pltpu.VMEM((H, W), jnp.float32),                         # sum
                pltpu.VMEM((H, W), jnp.float32),                         # max
                pltpu.VMEM((2, H + 2 * pad, W + 2 * pad), jnp.float32),  # feat
            ],
        ),
        compiler_params=pltpu.CompilerParams(
            dimension_semantics=("parallel", "arbitrary")),
    )(w_flat, x)
    return out


def spatial_attention_ref(x, w):
    """Pure-JAX reference mirroring the PyTorch forward."""
    avg = jnp.mean(x, axis=1, keepdims=True)
    mx = jnp.max(x, axis=1, keepdims=True)
    feat = jnp.concatenate([avg, mx], axis=1)            # (N, 2, H, W)
    pad = w.shape[-1] // 2
    out = jax.lax.conv_general_dilated(
        feat, w, window_strides=(1, 1),
        padding=((pad, pad), (pad, pad)),
        dimension_numbers=("NCHW", "OIHW", "NCHW"))
    return jax.nn.sigmoid(out)


if __name__ == "__main__":
    # Small shapes consistent with the module: kernel_size=7, any C works.
    N, C, H, W = 2, 4, 16, 16
    K = 7

    key = jax.random.PRNGKey(0)
    kx, kw = jax.random.split(key)
    x = jax.random.normal(kx, (N, C, H, W), dtype=jnp.float32)
    # Conv2d(2, 1, 7, padding=3, bias=False) weight: (1, 2, 7, 7)
    w = jax.random.normal(kw, (1, 2, K, K), dtype=jnp.float32) * 0.1

    out = spatial_attention(x, w)
    out = jax.block_until_ready(out)

    ref = spatial_attention_ref(x, w)
    assert out.shape == (N, 1, H, W)
    assert jnp.allclose(out, ref, atol=1e-5, rtol=1e-5), "mismatch vs reference"

    print("KERNEL_OK")
</pallas_src>

<mosaic_0001>
module attributes {stable_mosaic.version = 11 : i64} {
  func.func @_spatial_attention_kernel(%arg0: i32, %arg1: i32, %arg2: memref<98xf32, #tpu.memory_space<smem>>, %arg3: memref<1x4x16x16xf32, #tpu.memory_space<vmem>>, %arg4: memref<1x1x16x16xf32, #tpu.memory_space<vmem>>, %arg5: memref<16x16xf32, #tpu.memory_space<vmem>>, %arg6: memref<16x16xf32, #tpu.memory_space<vmem>>, %arg7: memref<2x22x22xf32, #tpu.memory_space<vmem>>) attributes {dimension_semantics = [#tpu.dimension_semantics<parallel>, #tpu.dimension_semantics<arbitrary>], iteration_bounds = array<i64: 2, 1>, scalar_prefetch = 0 : i64, scratch_operands = 3 : i64, tpu.core_type = #tpu.core_type<tc>, window_params = [{transform_indices = @transform_0, window_bounds = array<i64: 98>}, {transform_indices = @transform_1, window_bounds = array<i64: 1, 4, 16, 16>}, {transform_indices = @transform_2, window_bounds = array<i64: 1, 1, 16, 16>}]} {
    %c0 = arith.constant 0 : index
    %c0_0 = arith.constant 0 : index
    %c0_1 = arith.constant 0 : index
    %c0_2 = arith.constant 0 : index
    %0 = vector.load %arg3[%c0, %c0_0, %c0_1, %c0_2] : memref<1x4x16x16xf32, #tpu.memory_space<vmem>>, vector<1x4x16x16xf32>
    %1 = vector.shape_cast %0 : vector<1x4x16x16xf32> to vector<4x16x16xf32>
    %cst = arith.constant dense<0.000000e+00> : vector<16x16xf32>
    %2 = vector.multi_reduction <add>, %1, %cst [0] : vector<4x16x16xf32> to vector<16x16xf32>
    %cst_3 = arith.constant dense<0xFF800000> : vector<16x16xf32>
    %3 = vector.multi_reduction <maximumf>, %1, %cst_3 [0] : vector<4x16x16xf32> to vector<16x16xf32>
    %c0_i32 = arith.constant 0 : i32
    %4 = arith.cmpi eq, %arg1, %c0_i32 : i32
    %5 = arith.extui %4 : i1 to i32
    %c0_i32_4 = arith.constant 0 : i32
    %6 = arith.cmpi ne, %5, %c0_i32_4 : i32
    scf.if %6 {
      %cst_15 = arith.constant 0.000000e+00 : f32
      %16 = vector.broadcast %cst_15 : f32 to vector<16x16xf32>
      %c0_16 = arith.constant 0 : index
      %c0_17 = arith.constant 0 : index
      %17 = vector.load %arg5[%c0_16, %c0_17] : memref<16x16xf32, #tpu.memory_space<vmem>>, vector<16x16xf32>
      tpu.vector_store %arg5[%c0_16, %c0_17], %16 {strides = array<i32>} : memref<16x16xf32, #tpu.memory_space<vmem>>, vector<16x16xf32>,
      %cst_18 = arith.constant 0xFF800000 : f32
      %18 = vector.broadcast %cst_18 : f32 to vector<16x16xf32>
      %c0_19 = arith.constant 0 : index
      %c0_20 = arith.constant 0 : index
      %19 = vector.load %arg6[%c0_19, %c0_20] : memref<16x16xf32, #tpu.memory_space<vmem>>, vector<16x16xf32>
      tpu.vector_store %arg6[%c0_19, %c0_20], %18 {strides = array<i32>} : memref<16x16xf32, #tpu.memory_space<vmem>>, vector<16x16xf32>,
    } else {
    }
    %c0_5 = arith.constant 0 : index
    %c0_6 = arith.constant 0 : index
    %7 = vector.load %arg5[%c0_5, %c0_6] : memref<16x16xf32, #tpu.memory_space<vmem>>, vector<16x16xf32>
    %8 = arith.addf %7, %2 : vector<16x16xf32>
    %c0_7 = arith.constant 0 : index
    %c0_8 = arith.constant 0 : index
    %9 = vector.load %arg5[%c0_7, %c0_8] : memref<16x16xf32, #tpu.memory_space<vmem>>, vector<16x16xf32>
    tpu.vector_store %arg5[%c0_7, %c0_8], %8 {strides = array<i32>} : memref<16x16xf32, #tpu.memory_space<vmem>>, vector<16x16xf32>,
    %c0_9 = arith.constant 0 : index
    %c0_10 = arith.constant 0 : index
    %10 = vector.load %arg6[%c0_9, %c0_10] : memref<16x16xf32, #tpu.memory_space<vmem>>, vector<16x16xf32>
    %11 = arith.maximumf %10, %3 : vector<16x16xf32>
    %c0_11 = arith.constant 0 : index
    %c0_12 = arith.constant 0 : index
    %12 = vector.load %arg6[%c0_11, %c0_12] : memref<16x16xf32, #tpu.memory_space<vmem>>, vector<16x16xf32>
    tpu.vector_store %arg6[%c0_11, %c0_12], %11 {strides = array<i32>} : memref<16x16xf32, #tpu.memory_space<vmem>>, vector<16x16xf32>,
    %c0_i32_13 = arith.constant 0 : i32
    %13 = arith.cmpi eq, %arg1, %c0_i32_13 : i32
    %14 = arith.extui %13 : i1 to i32
    %c0_i32_14 = arith.constant 0 : i32
    %15 = arith.cmpi ne, %14, %c0_i32_14 : i32
    scf.if %15 {
      %cst_15 = arith.constant 0.000000e+00 : f32
      %16 = vector.broadcast %cst_15 : f32 to vector<2x22x22xf32>
      %c0_16 = arith.constant 0 : index
      %c0_17 = arith.constant 0 : index
      %c0_18 = arith.constant 0 : index
      %17 = vector.load %arg7[%c0_16, %c0_17, %c0_18] : memref<2x22x22xf32, #tpu.memory_space<vmem>>, vector<2x22x22xf32>
      tpu.vector_store %arg7[%c0_16, %c0_17, %c0_18], %16 {strides = array<i32>} : memref<2x22x22xf32, #tpu.memory_space<vmem>>, vector<2x22x22xf32>,
      %c0_19 = arith.constant 0 : index
      %c0_20 = arith.constant 0 : index
      %18 = vector.load %arg5[%c0_19, %c0_20] : memref<16x16xf32, #tpu.memory_space<vmem>>, vector<16x16xf32>
      %cst_21 = arith.constant 2.500000e-01 : f32
      %19 = vector.broadcast %cst_21 : f32 to vector<16x16xf32>
      %20 = arith.mulf %18, %19 : vector<16x16xf32>
      %c0_22 = arith.constant 0 : index
      %c3 = arith.constant 3 : index
      %c3_23 = arith.constant 3 : index
      %21 = vector.load %arg7[%c0_22, %c3, %c3_23] : memref<2x22x22xf32, #tpu.memory_space<vmem>>, vector<1x16x16xf32>
      %22 = vector.shape_cast %21 : vector<1x16x16xf32> to vector<16x16xf32>
      %23 = vector.shape_cast %20 : vector<16x16xf32> to vector<1x16x16xf32>
      tpu.vector_store %arg7[%c0_22, %c3, %c3_23], %23 {strides = array<i32>} : memref<2x22x22xf32, #tpu.memory_space<vmem>>, vector<1x16x16xf32>,
      %c0_24 = arith.constant 0 : index
      %c0_25 = arith.constant 0 : index
      %24 = vector.load %arg6[%c0_24, %c0_25] : memref<16x16xf32, #tpu.memory_space<vmem>>, vector<16x16xf32>
      %c1 = arith.constant 1 : index
      %c3_26 = arith.constant 3 : index
      %c3_27 = arith.constant 3 : index
      %25 = vector.load %arg7[%c1, %c3_26, %c3_27] : memref<2x22x22xf32, #tpu.memory_space<vmem>>, vector<1x16x16xf32>
      %26 = vector.shape_cast %25 : vector<1x16x16xf32> to vector<16x16xf32>
      %27 = vector.shape_cast %24 : vector<16x16xf32> to vector<1x16x16xf32>
      tpu.vector_store %arg7[%c1, %c3_26, %c3_27], %27 {strides = array<i32>} : memref<2x22x22xf32, #tpu.memory_space<vmem>>, vector<1x16x16xf32>,
      %cst_28 = arith.constant 0.000000e+00 : f32
      %28 = vector.broadcast %cst_28 : f32 to vector<16x16xf32>
      %c0_29 = arith.constant 0 : index
      %29 = memref.load %arg2[%c0_29] : memref<98xf32, #tpu.memory_space<smem>>
      %c0_30 = arith.constant 0 : index
      %c0_31 = arith.constant 0 : index
      %c0_32 = arith.constant 0 : index
      %30 = vector.load %arg7[%c0_30, %c0_31, %c0_32] : memref<2x22x22xf32, #tpu.memory_space<vmem>>, vector<1x16x16xf32>
      %31 = vector.shape_cast %30 : vector<1x16x16xf32> to vector<16x16xf32>
      %32 = vector.broadcast %29 : f32 to vector<16x16xf32>
      %33 = arith.mulf %32, %31 : vector<16x16xf32>
      %34 = arith.addf %28, %33 : vector<16x16xf32>
      %c1_33 = arith.constant 1 : index
      %35 = memref.load %arg2[%c1_33] : memref<98xf32, #tpu.memory_space<smem>>
      %c0_34 = arith.constant 0 : index
      %c0_35 = arith.constant 0 : index
      %c1_36 = arith.constant 1 : index
      %36 = vector.load %arg7[%c0_34, %c0_35, %c1_36] : memref<2x22x22xf32, #tpu.memory_space<vmem>>, vector<1x16x16xf32>
      %37 = vector.shape_cast %36 : vector<1x16x16xf32> to vector<16x16xf32>
      %38 = vector.broadcast %35 : f32 to vector<16x16xf32>
      %39 = arith.mulf %38, %37 : vector<16x16xf32>
      %40 = arith.addf %34, %39 : vector<16x16xf32>
      %c2 = arith.constant 2 : index
      %41 = memref.load %arg2[%c2] : memref<98xf32, #tpu.memory_space<smem>>
      %c0_37 = arith.constant 0 : index
      %c0_38 = arith.constant 0 : index
      %c2_39 = arith.constant 2 : index
      %42 = vector.load %arg7[%c0_37, %c0_38, %c2_39] : memref<2x22x22xf32, #tpu.memory_space<vmem>>, vector<1x16x16xf32>
      %43 = vector.shape_cast %42 : vector<1x16x16xf32> to vector<16x16xf32>
      %44 = vector.broadcast %41 : f32 to vector<16x16xf32>
      %45 = arith.mulf %44, %43 : vector<16x16xf32>
      %46 = arith.addf %40, %45 : vector<16x16xf32>
      %c3_40 = arith.constant 3 : index
      %47 = memref.load %arg2[%c3_40] : memref<98xf32, #tpu.memory_space<smem>>
      %c0_41 = arith.constant 0 : index
      %c0_42 = arith.constant 0 : index
      %c3_43 = arith.constant 3 : index
      %48 = vector.load %arg7[%c0_41, %c0_42, %c3_43] : memref<2x22x22xf32, #tpu.memory_space<vmem>>, vector<1x16x16xf32>
      %49 = vector.shape_cast %48 : vector<1x16x16xf32> to vector<16x16xf32>
      %50 = vector.broadcast %47 : f32 to vector<16x16xf32>
      %51 = arith.mulf %50, %49 : vector<16x16xf32>
      %52 = arith.addf %46, %51 : vector<16x16xf32>
      %c4 = arith.constant 4 : index
      %53 = memref.load %arg2[%c4] : memref<98xf32, #tpu.memory_space<smem>>
      %c0_44 = arith.constant 0 : index
      %c0_45 = arith.constant 0 : index
      %c4_46 = arith.constant 4 : index
      %54 = vector.load %arg7[%c0_44, %c0_45, %c4_46] : memref<2x22x22xf32, #tpu.memory_space<vmem>>, vector<1x16x16xf32>
      %55 = vector.shape_cast %54 : vector<1x16x16xf32> to vector<16x16xf32>
      %56 = vector.broadcast %53 : f32 to vector<16x16xf32>
      %57 = arith.mulf %56, %55 : vector<16x16xf32>
      %58 = arith.addf %52, %57 : vector<16x16xf32>
      %c5 = arith.constant 5 : index
      %59 = memref.load %arg2[%c5] : memref<98xf32, #tpu.memory_space<smem>>
      %c0_47 = arith.constant 0 : index
      %c0_48 = arith.constant 0 : index
      %c5_49 = arith.constant 5 : index
      %60 = vector.load %arg7[%c0_47, %c0_48, %c5_49] : memref<2x22x22xf32, #tpu.memory_space<vmem>>, vector<1x16x16xf32>
      %61 = vector.shape_cast %60 : vector<1x16x16xf32> to vector<16x16xf32>
      %62 = vector.broadcast %59 : f32 to vector<16x16xf32>
      %63 = arith.mulf %62, %61 : vector<16x16xf32>
      %64 = arith.addf %58, %63 : vector<16x16xf32>
      %c6 = arith.constant 6 : index
      %65 = memref.load %arg2[%c6] : memref<98xf32, #tpu.memory_space<smem>>
      %c0_50 = arith.constant 0 : index
      %c0_51 = arith.constant 0 : index
      %c6_52 = arith.constant 6 : index
      %66 = vector.load %arg7[%c0_50, %c0_51, %c6_52] : memref<2x22x22xf32, #tpu.memory_space<vmem>>, vector<1x16x16xf32>
      %67 = vector.shape_cast %66 : vector<1x16x16xf32> to vector<16x16xf32>
      %68 = vector.broadcast %65 : f32 to vector<16x16xf32>
      %69 = arith.mulf %68, %67 : vector<16x16xf32>
      %70 = arith.addf %64, %69 : vector<16x16xf32>
      %c7 = arith.constant 7 : index
      %71 = memref.load %arg2[%c7] : memref<98xf32, #tpu.memory_space<smem>>
      %c0_53 = arith.constant 0 : index
      %c1_54 = arith.constant 1 : index
      %c0_55 = arith.constant 0 : index
      %72 = vector.load %arg7[%c0_53, %c1_54, %c0_55] : memref<2x22x22xf32, #tpu.memory_space<vmem>>, vector<1x16x16xf32>
      %73 = vector.shape_cast %72 : vector<1x16x16xf32> to vector<16x16xf32>
      %74 = vector.broadcast %71 : f32 to vector<16x16xf32>
      %75 = arith.mulf %74, %73 : vector<16x16xf32>
      %76 = arith.addf %70, %75 : vector<16x16xf32>
      %c8 = arith.constant 8 : index
      %77 = memref.load %arg2[%c8] : memref<98xf32, #tpu.memory_space<smem>>
      %c0_56 = arith.constant 0 : index
      %c1_57 = arith.constant 1 : index
      %c1_58 = arith.constant 1 : index
      %78 = vector.load %arg7[%c0_56, %c1_57, %c1_58] : memref<2x22x22xf32, #tpu.memory_space<vmem>>, vector<1x16x16xf32>
      %79 = vector.shape_cast %78 : vector<1x16x16xf32> to vector<16x16xf32>
      %80 = vector.broadcast %77 : f32 to vector<16x16xf32>
      %81 = arith.mulf %80, %79 : vector<16x16xf32>
      %82 = arith.addf %76, %81 : vector<16x16xf32>
      %c9 = arith.constant 9 : index
      %83 = memref.load %arg2[%c9] : memref<98xf32, #tpu.memory_space<smem>>
      %c0_59 = arith.constant 0 : index
      %c1_60 = arith.constant 1 : index
      %c2_61 = arith.constant 2 : index
      %84 = vector.load %arg7[%c0_59, %c1_60, %c2_61] : memref<2x22x22xf32, #tpu.memory_space<vmem>>, vector<1x16x16xf32>
      %85 = vector.shape_cast %84 : vector<1x16x16xf32> to vector<16x16xf32>
      %86 = vector.broadcast %83 : f32 to vector<16x16xf32>
      %87 = arith.mulf %86, %85 : vector<16x16xf32>
      %88 = arith.addf %82, %87 : vector<16x16xf32>
      %c10 = arith.constant 10 : index
      %89 = memref.load %arg2[%c10] : memref<98xf32, #tpu.memory_space<smem>>
      %c0_62 = arith.constant 0 : index
      %c1_63 = arith.constant 1 : index
      %c3_64 = arith.constant 3 : index
      %90 = vector.load %arg7[%c0_62, %c1_63, %c3_64] : memref<2x22x22xf32, #tpu.memory_space<vmem>>, vector<1x16x16xf32>
      %91 = vector.shape_cast %90 : vector<1x16x16xf32> to vector<16x16xf32>
      %92 = vector.broadcast %89 : f32 to vector<16x16xf32>
      %93 = arith.mulf %92, %91 : vector<16x16xf32>
      %94 = arith.addf %88, %93 : vector<16x16xf32>
      %c11 = arith.constant 11 : index
      %95 = memref.load %arg2[%c11] : memref<98xf32, #tpu.memory_space<smem>>
      %c0_65 = arith.constant 0 : index
      %c1_66 = arith.constant 1 : index
      %c4_67 = arith.constant 4 : index
      %96 = vector.load %arg7[%c0_65, %c1_66, %c4_67] : memref<2x22x22xf32, #tpu.memory_space<vmem>>, vector<1x16x16xf32>
      %97 = vector.shape_cast %96 : vector<1x16x16xf32> to vector<16x16xf32>
      %98 = vector.broadcast %95 : f32 to vector<16x16xf32>
      %99 = arith.mulf %98, %97 : vector<16x16xf32>
      %100 = arith.addf %94, %99 : vector<16x16xf32>
      %c12 = arith.constant 12 : index
      %101 = memref.load %arg2[%c12] : memref<98xf32, #tpu.memory_space<smem>>
      %c0_68 = arith.constant 0 : index
      %c1_69 = arith.constant 1 : index
      %c5_70 = arith.constant 5 : index
      %102 = vector.load %arg7[%c0_68, %c1_69, %c5_70] : memref<2x22x22xf32, #tpu.memory_space<vmem>>, vector<1x16x16xf32>
      %103 = vector.shape_cast %102 : vector<1x16x16xf32> to vector<16x16xf32>
      %104 = vector.broadcast %101 : f32 to vector<16x16xf32>
      %105 = arith.mulf %104, %103 : vector<16x16xf32>
      %106 = arith.addf %100, %105 : vector<16x16xf32>
      %c13 = arith.constant 13 : index
      %107 = memref.load %arg2[%c13] : memref<98xf32, #tpu.memory_space<smem>>
      %c0_71 = arith.constant 0 : index
      %c1_72 = arith.constant 1 : index
      %c6_73 = arith.constant 6 : index
      %108 = vector.load %arg7[%c0_71, %c1_72, %c6_73] : memref<2x22x22xf32, #tpu.memory_space<vmem>>, vector<1x16x16xf32>
      %109 = vector.shape_cast %108 : vector<1x16x16xf32> to vector<16x16xf32>
      %110 = vector.broadcast %107 : f32 to vector<16x16xf32>
      %111 = arith.mulf %110, %109 : vector<16x16xf32>
      %112 = arith.addf %106, %111 : vector<16x16xf32>
      %c14 = arith.constant 14 : index
      %113 = memref.load %arg2[%c14] : memref<98xf32, #tpu.memory_space<smem>>
      %c0_74 = arith.constant 0 : index
      %c2_75 = arith.constant 2 : index
      %c0_76 = arith.constant 0 : index
      %114 = vector.load %arg7[%c0_74, %c2_75, %c0_76] : memref<2x22x22xf32, #tpu.memory_space<vmem>>, vector<1x16x16xf32>
      %115 = vector.shape_cast %114 : vector<1x16x16xf32> to vector<16x16xf32>
      %116 = vector.broadcast %113 : f32 to vector<16x16xf32>
      %117 = arith.mulf %116, %115 : vector<16x16xf32>
      %118 = arith.addf %112, %117 : vector<16x16xf32>
      %c15 = arith.constant 15 : index
      %119 = memref.load %arg2[%c15] : memref<98xf32, #tpu.memory_space<smem>>
      %c0_77 = arith.constant 0 : index
      %c2_78 = arith.constant 2 : index
      %c1_79 = arith.constant 1 : index
      %120 = vector.load %arg7[%c0_77, %c2_78, %c1_79] : memref<2x22x22xf32, #tpu.memory_space<vmem>>, vector<1x16x16xf32>
      %121 = vector.shape_cast %120 : vector<1x16x16xf32> to vector<16x16xf32>
      %122 = vector.broadcast %119 : f32 to vector<16x16xf32>
      %123 = arith.mulf %122, %121 : vector<16x16xf32>
      %124 = arith.addf %118, %123 : vector<16x16xf32>
      %c16 = arith.constant 16 : index
      %125 = memref.load %arg2[%c16] : memref<98xf32, #tpu.memory_space<smem>>
      %c0_80 = arith.constant 0 : index
      %c2_81 = arith.constant 2 : index
      %c2_82 = arith.constant 2 : index
      %126 = vector.load %arg7[%c0_80, %c2_81, %c2_82] : memref<2x22x22xf32, #tpu.memory_space<vmem>>, vector<1x16x16xf32>
      %127 = vector.shape_cast %126 : vector<1x16x16xf32> to vector<16x16xf32>
      %128 = vector.broadcast %125 : f32 to vector<16x16xf32>
      %129 = arith.mulf %128, %127 : vector<16x16xf32>
      %130 = arith.addf %124, %129 : vector<16x16xf32>
      %c17 = arith.constant 17 : index
      %131 = memref.load %arg2[%c17] : memref<98xf32, #tpu.memory_space<smem>>
      %c0_83 = arith.constant 0 : index
      %c2_84 = arith.constant 2 : index
      %c3_85 = arith.constant 3 : index
      %132 = vector.load %arg7[%c0_83, %c2_84, %c3_85] : memref<2x22x22xf32, #tpu.memory_space<vmem>>, vector<1x16x16xf32>
      %133 = vector.shape_cast %132 : vector<1x16x16xf32> to vector<16x16xf32>
      %134 = vector.broadcast %131 : f32 to vector<16x16xf32>
      %135 = arith.mulf %134, %133 : vector<16x16xf32>
      %136 = arith.addf %130, %135 : vector<16x16xf32>
      %c18 = arith.constant 18 : index
      %137 = memref.load %arg2[%c18] : memref<98xf32, #tpu.memory_space<smem>>
      %c0_86 = arith.constant 0 : index
      %c2_87 = arith.constant 2 : index
      %c4_88 = arith.constant 4 : index
      %138 = vector.load %arg7[%c0_86, %c2_87, %c4_88] : memref<2x22x22xf32, #tpu.memory_space<vmem>>, vector<1x16x16xf32>
      %139 = vector.shape_cast %138 : vector<1x16x16xf32> to vector<16x16xf32>
      %140 = vector.broadcast %137 : f32 to vector<16x16xf32>
      %141 = arith.mulf %140, %139 : vector<16x16xf32>
      %142 = arith.addf %136, %141 : vector<16x16xf32>
      %c19 = arith.constant 19 : index
      %143 = memref.load %arg2[%c19] : memref<98xf32, #tpu.memory_space<smem>>
      %c0_89 = arith.constant 0 : index
      %c2_90 = arith.constant 2 : index
      %c5_91 = arith.constant 5 : index
      %144 = vector.load %arg7[%c0_89, %c2_90, %c5_91] : memref<2x22x22xf32, #tpu.memory_space<vmem>>, vector<1x16x16xf32>
      %145 = vector.shape_cast %144 : vector<1x16x16xf32> to vector<16x16xf32>
      %146 = vector.broadcast %143 : f32 to vector<16x16xf32>
      %147 = arith.mulf %146, %145 : vector<16x16xf32>
      %148 = arith.addf %142, %147 : vector<16x16xf32>
      %c20 = arith.constant 20 : index
      %149 = memref.load %arg2[%c20] : memref<98xf32, #tpu.memory_space<smem>>
      %c0_92 = arith.constant 0 : index
      %c2_93 = arith.constant 2 : index
      %c6_94 = arith.constant 6 : index
      %150 = vector.load %arg7[%c0_92, %c2_93, %c6_94] : memref<2x22x22xf32, #tpu.memory_space<vmem>>, vector<1x16x16xf32>
      %151 = vector.shape_cast %150 : vector<1x16x16xf32> to vector<16x16xf32>
      %152 = vector.broadcast %149 : f32 to vector<16x16xf32>
      %153 = arith.mulf %152, %151 : vector<16x16xf32>
      %154 = arith.addf %148, %153 : vector<16x16xf32>
      %c21 = arith.constant 21 : index
      %155 = memref.load %arg2[%c21] : memref<98xf32, #tpu.memory_space<smem>>
      %c0_95 = arith.constant 0 : index
      %c3_96 = arith.constant 3 : index
      %c0_97 = arith.constant 0 : index
      %156 = vector.load %arg7[%c0_95, %c3_96, %c0_97] : memref<2x22x22xf32, #tpu.memory_space<vmem>>, vector<1x16x16xf32>
      %157 = vector.shape_cast %156 : vector<1x16x16xf32> to vector<16x16xf32>
      %158 = vector.broadcast %155 : f32 to vector<16x16xf32>
      %159 = arith.mulf %158, %157 : vector<16x16xf32>
      %160 = arith.addf %154, %159 : vector<16x16xf32>
      %c22 = arith.constant 22 : index
      %161 = memref.load %arg2[%c22] : memref<98xf32, #tpu.memory_space<smem>>
      %c0_98 = arith.constant 0 : index
      %c3_99 = arith.constant 3 : index
      %c1_100 = arith.constant 1 : index
      %162 = vector.load %arg7[%c0_98, %c3_99, %c1_100] : memref<2x22x22xf32, #tpu.memory_space<vmem>>, vector<1x16x16xf32>
      %163 = vector.shape_cast %162 : vector<1x16x16xf32> to vector<16x16xf32>
      %164 = vector.broadcast %161 : f32 to vector<16x16xf32>
      %165 = arith.mulf %164, %163 : vector<16x16xf32>
      %166 = arith.addf %160, %165 : vector<16x16xf32>
      %c23 = arith.constant 23 : index
      %167 = memref.load %arg2[%c23] : memref<98xf32, #tpu.memory_space<smem>>
      %c0_101 = arith.constant 0 : index
      %c3_102 = arith.constant 3 : index
      %c2_103 = arith.constant 2 : index
      %168 = vector.load %arg7[%c0_101, %c3_102, %c2_103] : memref<2x22x22xf32, #tpu.memory_space<vmem>>, vector<1x16x16xf32>
      %169 = vector.shape_cast %168 : vector<1x16x16xf32> to vector<16x16xf32>
      %170 = vector.broadcast %167 : f32 to vector<16x16xf32>
      %171 = arith.mulf %170, %169 : vector<16x16xf32>
      %172 = arith.addf %166, %171 : vector<16x16xf32>
      %c24 = arith.constant 24 : index
      %173 = memref.load %arg2[%c24] : memref<98xf32, #tpu.memory_space<smem>>
      %c0_104 = arith.constant 0 : index
      %c3_105 = arith.constant 3 : index
      %c3_106 = arith.constant 3 : index
      %174 = vector.load %arg7[%c0_104, %c3_105, %c3_106] : memref<2x22x22xf32, #tpu.memory_space<vmem>>, vector<1x16x16xf32>
      %175 = vector.shape_cast %174 : vector<1x16x16xf32> to vector<16x16xf32>
      %176 = vector.broadcast %173 : f32 to vector<16x16xf32>
      %177 = arith.mulf %176, %175 : vector<16x16xf32>
      %178 = arith.addf %172, %177 : vector<16x16xf32>
      %c25 = arith.constant 25 : index
      %179 = memref.load %arg2[%c25] : memref<98xf32, #tpu.memory_space<smem>>
      %c0_107 = arith.constant 0 : index
      %c3_108 = arith.constant 3 : index
      %c4_109 = arith.constant 4 : index
      %180 = vector.load %arg7[%c0_107, %c3_108, %c4_109] : memref<2x22x22xf32, #tpu.memory_space<vmem>>, vector<1x16x16xf32>
      %181 = vector.shape_cast %180 : vector<1x16x16xf32> to vector<16x16xf32>
      %182 = vector.broadcast %179 : f32 to vector<16x16xf32>
      %183 = arith.mulf %182, %181 : vector<16x16xf32>
      %184 = arith.addf %178, %183 : vector<16x16xf32>
      %c26 = arith.constant 26 : index
      %185 = memref.load %arg2[%c26] : memref<98xf32, #tpu.memory_space<smem>>
      %c0_110 = arith.constant 0 : index
      %c3_111 = arith.constant 3 : index
      %c5_112 = arith.constant 5 : index
      %186 = vector.load %arg7[%c0_110, %c3_111, %c5_112] : memref<2x22x22xf32, #tpu.memory_space<vmem>>, vector<1x16x16xf32>
      %187 = vector.shape_cast %186 : vector<1x16x16xf32> to vector<16x16xf32>
      %188 = vector.broadcast %185 : f32 to vector<16x16xf32>
      %189 = arith.mulf %188, %187 : vector<16x16xf32>
      %190 = arith.addf %184, %189 : vector<16x16xf32>
      %c27 = arith.constant 27 : index
      %191 = memref.load %arg2[%c27] : memref<98xf32, #tpu.memory_space<smem>>
      %c0_113 = arith.constant 0 : index
      %c3_114 = arith.constant 3 : index
      %c6_115 = arith.constant 6 : index
      %192 = vector.load %arg7[%c0_113, %c3_114, %c6_115] : memref<2x22x22xf32, #tpu.memory_space<vmem>>, vector<1x16x16xf32>
      %193 = vector.shape_cast %192 : vector<1x16x16xf32> to vector<16x16xf32>
      %194 = vector.broadcast %191 : f32 to vector<16x16xf32>
      %195 = arith.mulf %194, %193 : vector<16x16xf32>
      %196 = arith.addf %190, %195 : vector<16x16xf32>
      %c28 = arith.constant 28 : index
      %197 = memref.load %arg2[%c28] : memref<98xf32, #tpu.memory_space<smem>>
      %c0_116 = arith.constant 0 : index
      %c4_117 = arith.constant 4 : index
      %c0_118 = arith.constant 0 : index
      %198 = vector.load %arg7[%c0_116, %c4_117, %c0_118] : memref<2x22x22xf32, #tpu.memory_space<vmem>>, vector<1x16x16xf32>
      %199 = vector.shape_cast %198 : vector<1x16x16xf32> to vector<16x16xf32>
      %200 = vector.broadcast %197 : f32 to vector<16x16xf32>
      %201 = arith.mulf %200, %199 : vector<16x16xf32>
      %202 = arith.addf %196, %201 : vector<16x16xf32>
      %c29 = arith.constant 29 : index
      %203 = memref.load %arg2[%c29] : memref<98xf32, #tpu.memory_space<smem>>
      %c0_119 = arith.constant 0 : index
      %c4_120 = arith.constant 4 : index
      %c1_121 = arith.constant 1 : index
      %204 = vector.load %arg7[%c0_119, %c4_120, %c1_121] : memref<2x22x22xf32, #tpu.memory_space<vmem>>, vector<1x16x16xf32>
      %205 = vector.shape_cast %204 : vector<1x16x16xf32> to vector<16x16xf32>
      %206 = vector.broadcast %203 : f32 to vector<16x16xf32>
      %207 = arith.mulf %206, %205 : vector<16x16xf32>
      %208 = arith.addf %202, %207 : vector<16x16xf32>
      %c30 = arith.constant 30 : index
      %209 = memref.load %arg2[%c30] : memref<98xf32, #tpu.memory_space<smem>>
      %c0_122 = arith.constant 0 : index
      %c4_123 = arith.constant 4 : index
      %c2_124 = arith.constant 2 : index
      %210 = vector.load %arg7[%c0_122, %c4_123, %c2_124] : memref<2x22x22xf32, #tpu.memory_space<vmem>>, vector<1x16x16xf32>
      %211 = vector.shape_cast %210 : vector<1x16x16xf32> to vector<16x16xf32>
      %212 = vector.broadcast %209 : f32 to vector<16x16xf32>
      %213 = arith.mulf %212, %211 : vector<16x16xf32>
      %214 = arith.addf %208, %213 : vector<16x16xf32>
      %c31 = arith.constant 31 : index
      %215 = memref.load %arg2[%c31] : memref<98xf32, #tpu.memory_space<smem>>
      %c0_125 = arith.constant 0 : index
      %c4_126 = arith.constant 4 : index
      %c3_127 = arith.constant 3 : index
      %216 = vector.load %arg7[%c0_125, %c4_126, %c3_127] : memref<2x22x22xf32, #tpu.memory_space<vmem>>, vector<1x16x16xf32>
      %217 = vector.shape_cast %216 : vector<1x16x16xf32> to vector<16x16xf32>
      %218 = vector.broadcast %215 : f32 to vector<16x16xf32>
      %219 = arith.mulf %218, %217 : vector<16x16xf32>
      %220 = arith.addf %214, %219 : vector<16x16xf32>
      %c32 = arith.constant 32 : index
      %221 = memref.load %arg2[%c32] : memref<98xf32, #tpu.memory_space<smem>>
      %c0_128 = arith.constant 0 : index
      %c4_129 = arith.constant 4 : index
      %c4_130 = arith.constant 4 : index
      %222 = vector.load %arg7[%c0_128, %c4_129, %c4_130] : memref<2x22x22xf32, #tpu.memory_space<vmem>>, vector<1x16x16xf32>
      %223 = vector.shape_cast %222 : vector<1x16x16xf32> to vector<16x16xf32>
      %224 = vector.broadcast %221 : f32 to vector<16x16xf32>
      %225 = arith.mulf %224, %223 : vector<16x16xf32>
      %226 = arith.addf %220, %225 : vector<16x16xf32>
      %c33 = arith.constant 33 : index
      %227 = memref.load %arg2[%c33] : memref<98xf32, #tpu.memory_space<smem>>
      %c0_131 = arith.constant 0 : index
      %c4_132 = arith.constant 4 : index
      %c5_133 = arith.constant 5 : index
      %228 = vector.load %arg7[%c0_131, %c4_132, %c5_133] : memref<2x22x22xf32, #tpu.memory_space<vmem>>, vector<1x16x16xf32>
      %229 = vector.shape_cast %228 : vector<1x16x16xf32> to vector<16x16xf32>
      %230 = vector.broadcast %227 : f32 to vector<16x16xf32>
      %231 = arith.mulf %230, %229 : vector<16x16xf32>
      %232 = arith.addf %226, %231 : vector<16x16xf32>
      %c34 = arith.constant 34 : index
      %233 = memref.load %arg2[%c34] : memref<98xf32, #tpu.memory_space<smem>>
      %c0_134 = arith.constant 0 : index
      %c4_135 = arith.constant 4 : index
      %c6_136 = arith.constant 6 : index
      %234 = vector.load %arg7[%c0_134, %c4_135, %c6_136] : memref<2x22x22xf32, #tpu.memory_space<vmem>>, vector<1x16x16xf32>
      %235 = vector.shape_cast %234 : vector<1x16x16xf32> to vector<16x16xf32>
      %236 = vector.broadcast %233 : f32 to vector<16x16xf32>
      %237 = arith.mulf %236, %235 : vector<16x16xf32>
      %238 = arith.addf %232, %237 : vector<16x16xf32>
      %c35 = arith.constant 35 : index
      %239 = memref.load %arg2[%c35] : memref<98xf32, #tpu.memory_space<smem>>
      %c0_137 = arith.constant 0 : index
      %c5_138 = arith.constant 5 : index
      %c0_139 = arith.constant 0 : index
      %240 = vector.load %arg7[%c0_137, %c5_138, %c0_139] : memref<2x22x22xf32, #tpu.memory_space<vmem>>, vector<1x16x16xf32>
      %241 = vector.shape_cast %240 : vector<1x16x16xf32> to vector<16x16xf32>
      %242 = vector.broadcast %239 : f32 to vector<16x16xf32>
      %243 = arith.mulf %242, %241 : vector<16x16xf32>
      %244 = arith.addf %238, %243 : vector<16x16xf32>
      %c36 = arith.constant 36 : index
      %245 = memref.load %arg2[%c36] : memref<98xf32, #tpu.memory_space<smem>>
      %c0_140 = arith.constant 0 : index
      %c5_141 = arith.constant 5 : index
      %c1_142 = arith.constant 1 : index
      %246 = vector.load %arg7[%c0_140, %c5_141, %c1_142] : memref<2x22x22xf32, #tpu.memory_space<vmem>>, vector<1x16x16xf32>
      %247 = vector.shape_cast %246 : vector<1x16x16xf32> to vector<16x16xf32>
      %248 = vector.broadcast %245 : f32 to vector<16x16xf32>
      %249 = arith.mulf %248, %247 : vector<16x16xf32>
      %250 = arith.addf %244, %249 : vector<16x16xf32>
      %c37 = arith.constant 37 : index
      %251 = memref.load %arg2[%c37] : memref<98xf32, #tpu.memory_space<smem>>
      %c0_143 = arith.constant 0 : index
      %c5_144 = arith.constant 5 : index
      %c2_145 = arith.constant 2 : index
      %252 = vector.load %arg7[%c0_143, %c5_144, %c2_145] : memref<2x22x22xf32, #tpu.memory_space<vmem>>, vector<1x16x16xf32>
      %253 = vector.shape_cast %252 : vector<1x16x16xf32> to vector<16x16xf32>
      %254 = vector.broadcast %251 : f32 to vector<16x16xf32>
      %255 = arith.mulf %254, %253 : vector<16x16xf32>
      %256 = arith.addf %250, %255 : vector<16x16xf32>
      %c38 = arith.constant 38 : index
      %257 = memref.load %arg2[%c38] : memref<98xf32, #tpu.memory_space<smem>>
      %c0_146 = arith.constant 0 : index
      %c5_147 = arith.constant 5 : index
      %c3_148 = arith.constant 3 : index
      %258 = vector.load %arg7[%c0_146, %c5_147, %c3_148] : memref<2x22x22xf32, #tpu.memory_space<vmem>>, vector<1x16x16xf32>
      %259 = vector.shape_cast %258 : vector<1x16x16xf32> to vector<16x16xf32>
      %260 = vector.broadcast %257 : f32 to vector<16x16xf32>
      %261 = arith.mulf %260, %259 : vector<16x16xf32>
      %262 = arith.addf %256, %261 : vector<16x16xf32>
      %c39 = arith.constant 39 : index
      %263 = memref.load %arg2[%c39] : memref<98xf32, #tpu.memory_space<smem>>
      %c0_149 = arith.constant 0 : index
      %c5_150 = arith.constant 5 : index
      %c4_151 = arith.constant 4 : index
      %264 = vector.load %arg7[%c0_149, %c5_150, %c4_151] : memref<2x22x22xf32, #tpu.memory_space<vmem>>, vector<1x16x16xf32>
      %265 = vector.shape_cast %264 : vector<1x16x16xf32> to vector<16x16xf32>
      %266 = vector.broadcast %263 : f32 to vector<16x16xf32>
      %267 = arith.mulf %266, %265 : vector<16x16xf32>
      %268 = arith.addf %262, %267 : vector<16x16xf32>
      %c40 = arith.constant 40 : index
      %269 = memref.load %arg2[%c40] : memref<98xf32, #tpu.memory_space<smem>>
      %c0_152 = arith.constant 0 : index
      %c5_153 = arith.constant 5 : index
      %c5_154 = arith.constant 5 : index
      %270 = vector.load %arg7[%c0_152, %c5_153, %c5_154] : memref<2x22x22xf32, #tpu.memory_space<vmem>>, vector<1x16x16xf32>
      %271 = vector.shape_cast %270 : vector<1x16x16xf32> to vector<16x16xf32>
      %272 = vector.broadcast %269 : f32 to vector<16x16xf32>
      %273 = arith.mulf %272, %271 : vector<16x16xf32>
      %274 = arith.addf %268, %273 : vector<16x16xf32>
      %c41 = arith.constant 41 : index
      %275 = memref.load %arg2[%c41] : memref<98xf32, #tpu.memory_space<smem>>
      %c0_155 = arith.constant 0 : index
      %c5_156 = arith.constant 5 : index
      %c6_157 = arith.constant 6 : index
      %276 = vector.load %arg7[%c0_155, %c5_156, %c6_157] : memref<2x22x22xf32, #tpu.memory_space<vmem>>, vector<1x16x16xf32>
      %277 = vector.shape_cast %276 : vector<1x16x16xf32> to vector<16x16xf32>
      %278 = vector.broadcast %275 : f32 to vector<16x16xf32>
      %279 = arith.mulf %278, %277 : vector<16x16xf32>
      %280 = arith.addf %274, %279 : vector<16x16xf32>
      %c42 = arith.constant 42 : index
      %281 = memref.load %arg2[%c42] : memref<98xf32, #tpu.memory_space<smem>>
      %c0_158 = arith.constant 0 : index
      %c6_159 = arith.constant 6 : index
      %c0_160 = arith.constant 0 : index
      %282 = vector.load %arg7[%c0_158, %c6_159, %c0_160] : memref<2x22x22xf32, #tpu.memory_space<vmem>>, vector<1x16x16xf32>
      %283 = vector.shape_cast %282 : vector<1x16x16xf32> to vector<16x16xf32>
      %284 = vector.broadcast %281 : f32 to vector<16x16xf32>
      %285 = arith.mulf %284, %283 : vector<16x16xf32>
      %286 = arith.addf %280, %285 : vector<16x16xf32>
      %c43 = arith.constant 43 : index
      %287 = memref.load %arg2[%c43] : memref<98xf32, #tpu.memory_space<smem>>
      %c0_161 = arith.constant 0 : index
      %c6_162 = arith.constant 6 : index
      %c1_163 = arith.constant 1 : index
      %288 = vector.load %arg7[%c0_161, %c6_162, %c1_163] : memref<2x22x22xf32, #tpu.memory_space<vmem>>, vector<1x16x16xf32>
      %289 = vector.shape_cast %288 : vector<1x16x16xf32> to vector<16x16xf32>
      %290 = vector.broadcast %287 : f32 to vector<16x16xf32>
      %291 = arith.mulf %290, %289 : vector<16x16xf32>
      %292 = arith.addf %286, %291 : vector<16x16xf32>
      %c44 = arith.constant 44 : index
      %293 = memref.load %arg2[%c44] : memref<98xf32, #tpu.memory_space<smem>>
      %c0_164 = arith.constant 0 : index
      %c6_165 = arith.constant 6 : index
      %c2_166 = arith.constant 2 : index
      %294 = vector.load %arg7[%c0_164, %c6_165, %c2_166] : memref<2x22x22xf32, #tpu.memory_space<vmem>>, vector<1x16x16xf32>
      %295 = vector.shape_cast %294 : vector<1x16x16xf32> to vector<16x16xf32>
      %296 = vector.broadcast %293 : f32 to vector<16x16xf32>
      %297 = arith.mulf %296, %295 : vector<16x16xf32>
      %298 = arith.addf %292, %297 : vector<16x16xf32>
      %c45 = arith.constant 45 : index
      %299 = memref.load %arg2[%c45] : memref<98xf32, #tpu.memory_space<smem>>
      %c0_167 = arith.constant 0 : index
      %c6_168 = arith.constant 6 : index
      %c3_169 = arith.constant 3 : index
      %300 = vector.load %arg7[%c0_167, %c6_168, %c3_169] : memref<2x22x22xf32, #tpu.memory_space<vmem>>, vector<1x16x16xf32>
      %301 = vector.shape_cast %300 : vector<1x16x16xf32> to vector<16x16xf32>
      %302 = vector.broadcast %299 : f32 to vector<16x16xf32>
      %303 = arith.mulf %302, %301 : vector<16x16xf32>
      %304 = arith.addf %298, %303 : vector<16x16xf32>
      %c46 = arith.constant 46 : index
      %305 = memref.load %arg2[%c46] : memref<98xf32, #tpu.memory_space<smem>>
      %c0_170 = arith.constant 0 : index
      %c6_171 = arith.constant 6 : index
      %c4_172 = arith.constant 4 : index
      %306 = vector.load %arg7[%c0_170, %c6_171, %c4_172] : memref<2x22x22xf32, #tpu.memory_space<vmem>>, vector<1x16x16xf32>
      %307 = vector.shape_cast %306 : vector<1x16x16xf32> to vector<16x16xf32>
      %308 = vector.broadcast %305 : f32 to vector<16x16xf32>
      %309 = arith.mulf %308, %307 : vector<16x16xf32>
      %310 = arith.addf %304, %309 : vector<16x16xf32>
      %c47 = arith.constant 47 : index
      %311 = memref.load %arg2[%c47] : memref<98xf32, #tpu.memory_space<smem>>
      %c0_173 = arith.constant 0 : index
      %c6_174 = arith.constant 6 : index
      %c5_175 = arith.constant 5 : index
      %312 = vector.load %arg7[%c0_173, %c6_174, %c5_175] : memref<2x22x22xf32, #tpu.memory_space<vmem>>, vector<1x16x16xf32>
      %313 = vector.shape_cast %312 : vector<1x16x16xf32> to vector<16x16xf32>
      %314 = vector.broadcast %311 : f32 to vector<16x16xf32>
      %315 = arith.mulf %314, %313 : vector<16x16xf32>
      %316 = arith.addf %310, %315 : vector<16x16xf32>
      %c48 = arith.constant 48 : index
      %317 = memref.load %arg2[%c48] : memref<98xf32, #tpu.memory_space<smem>>
      %c0_176 = arith.constant 0 : index
      %c6_177 = arith.constant 6 : index
      %c6_178 = arith.constant 6 : index
      %318 = vector.load %arg7[%c0_176, %c6_177, %c6_178] : memref<2x22x22xf32, #tpu.memory_space<vmem>>, vector<1x16x16xf32>
      %319 = vector.shape_cast %318 : vector<1x16x16xf32> to vector<16x16xf32>
      %320 = vector.broadcast %317 : f32 to vector<16x16xf32>
      %321 = arith.mulf %320, %319 : vector<16x16xf32>
      %322 = arith.addf %316, %321 : vector<16x16xf32>
      %c49 = arith.constant 49 : index
      %323 = memref.load %arg2[%c49] : memref<98xf32, #tpu.memory_space<smem>>
      %c1_179 = arith.constant 1 : index
      %c0_180 = arith.constant 0 : index
      %c0_181 = arith.constant 0 : index
      %324 = vector.load %arg7[%c1_179, %c0_180, %c0_181] : memref<2x22x22xf32, #tpu.memory_space<vmem>>, vector<1x16x16xf32>
      %325 = vector.shape_cast %324 : vector<1x16x16xf32> to vector<16x16xf32>
      %326 = vector.broadcast %323 : f32 to vector<16x16xf32>
      %327 = arith.mulf %326, %325 : vector<16x16xf32>
      %328 = arith.addf %322, %327 : vector<16x16xf32>
      %c50 = arith.constant 50 : index
      %329 = memref.load %arg2[%c50] : memref<98xf32, #tpu.memory_space<smem>>
      %c1_182 = arith.constant 1 : index
      %c0_183 = arith.constant 0 : index
      %c1_184 = arith.constant 1 : index
      %330 = vector.load %arg7[%c1_182, %c0_183, %c1_184] : memref<2x22x22xf32, #tpu.memory_space<vmem>>, vector<1x16x16xf32>
      %331 = vector.shape_cast %330 : vector<1x16x16xf32> to vector<16x16xf32>
      %332 = vector.broadcast %329 : f32 to vector<16x16xf32>
      %333 = arith.mulf %332, %331 : vector<16x16xf32>
      %334 = arith.addf %328, %333 : vector<16x16xf32>
      %c51 = arith.constant 51 : index
      %335 = memref.load %arg2[%c51] : memref<98xf32, #tpu.memory_space<smem>>
      %c1_185 = arith.constant 1 : index
      %c0_186 = arith.constant 0 : index
      %c2_187 = arith.constant 2 : index
      %336 = vector.load %arg7[%c1_185, %c0_186, %c2_187] : memref<2x22x22xf32, #tpu.memory_space<vmem>>, vector<1x16x16xf32>
      %337 = vector.shape_cast %336 : vector<1x16x16xf32> to vector<16x16xf32>
      %338 = vector.broadcast %335 : f32 to vector<16x16xf32>
      %339 = arith.mulf %338, %337 : vector<16x16xf32>
      %340 = arith.addf %334, %339 : vector<16x16xf32>
      %c52 = arith.constant 52 : index
      %341 = memref.load %arg2[%c52] : memref<98xf32, #tpu.memory_space<smem>>
      %c1_188 = arith.constant 1 : index
      %c0_189 = arith.constant 0 : index
      %c3_190 = arith.constant 3 : index
      %342 = vector.load %arg7[%c1_188, %c0_189, %c3_190] : memref<2x22x22xf32, #tpu.memory_space<vmem>>, vector<1x16x16xf32>
      %343 = vector.shape_cast %342 : vector<1x16x16xf32> to vector<16x16xf32>
      %344 = vector.broadcast %341 : f32 to vector<16x16xf32>
      %345 = arith.mulf %344, %343 : vector<16x16xf32>
      %346 = arith.addf %340, %345 : vector<16x16xf32>
      %c53 = arith.constant 53 : index
      %347 = memref.load %arg2[%c53] : memref<98xf32, #tpu.memory_space<smem>>
      %c1_191 = arith.constant 1 : index
      %c0_192 = arith.constant 0 : index
      %c4_193 = arith.constant 4 : index
      %348 = vector.load %arg7[%c1_191, %c0_192, %c4_193] : memref<2x22x22xf32, #tpu.memory_space<vmem>>, vector<1x16x16xf32>
      %349 = vector.shape_cast %348 : vector<1x16x16xf32> to vector<16x16xf32>
      %350 = vector.broadcast %347 : f32 to vector<16x16xf32>
      %351 = arith.mulf %350, %349 : vector<16x16xf32>
      %352 = arith.addf %346, %351 : vector<16x16xf32>
      %c54 = arith.constant 54 : index
      %353 = memref.load %arg2[%c54] : memref<98xf32, #tpu.memory_space<smem>>
      %c1_194 = arith.constant 1 : index
      %c0_195 = arith.constant 0 : index
      %c5_196 = arith.constant 5 : index
      %354 = vector.load %arg7[%c1_194, %c0_195, %c5_196] : memref<2x22x22xf32, #tpu.memory_space<vmem>>, vector<1x16x16xf32>
      %355 = vector.shape_cast %354 : vector<1x16x16xf32> to vector<16x16xf32>
      %356 = vector.broadcast %353 : f32 to vector<16x16xf32>
      %357 = arith.mulf %356, %355 : vector<16x16xf32>
      %358 = arith.addf %352, %357 : vector<16x16xf32>
      %c55 = arith.constant 55 : index
      %359 = memref.load %arg2[%c55] : memref<98xf32, #tpu.memory_space<smem>>
      %c1_197 = arith.constant 1 : index
      %c0_198 = arith.constant 0 : index
      %c6_199 = arith.constant 6 : index
      %360 = vector.load %arg7[%c1_197, %c0_198, %c6_199] : memref<2x22x22xf32, #tpu.memory_space<vmem>>, vector<1x16x16xf32>
      %361 = vector.shape_cast %360 : vector<1x16x16xf32> to vector<16x16xf32>
      %362 = vector.broadcast %359 : f32 to vector<16x16xf32>
      %363 = arith.mulf %362, %361 : vector<16x16xf32>
      %364 = arith.addf %358, %363 : vector<16x16xf32>
      %c56 = arith.constant 56 : index
      %365 = memref.load %arg2[%c56] : memref<98xf32, #tpu.memory_space<smem>>
      %c1_200 = arith.constant 1 : index
      %c1_201 = arith.constant 1 : index
      %c0_202 = arith.constant 0 : index
      %366 = vector.load %arg7[%c1_200, %c1_201, %c0_202] : memref<2x22x22xf32, #tpu.memory_space<vmem>>, vector<1x16x16xf32>
      %367 = vector.shape_cast %366 : vector<1x16x16xf32> to vector<16x16xf32>
      %368 = vector.broadcast %365 : f32 to vector<16x16xf32>
      %369 = arith.mulf %368, %367 : vector<16x16xf32>
      %370 = arith.addf %364, %369 : vector<16x16xf32>
      %c57 = arith.constant 57 : index
      %371 = memref.load %arg2[%c57] : memref<98xf32, #tpu.memory_space<smem>>
      %c1_203 = arith.constant 1 : index
      %c1_204 = arith.constant 1 : index
      %c1_205 = arith.constant 1 : index
      %372 = vector.load %arg7[%c1_203, %c1_204, %c1_205] : memref<2x22x22xf32, #tpu.memory_space<vmem>>, vector<1x16x16xf32>
      %373 = vector.shape_cast %372 : vector<1x16x16xf32> to vector<16x16xf32>
      %374 = vector.broadcast %371 : f32 to vector<16x16xf32>
      %375 = arith.mulf %374, %373 : vector<16x16xf32>
      %376 = arith.addf %370, %375 : vector<16x16xf32>
      %c58 = arith.constant 58 : index
      %377 = memref.load %arg2[%c58] : memref<98xf32, #tpu.memory_space<smem>>
      %c1_206 = arith.constant 1 : index
      %c1_207 = arith.constant 1 : index
      %c2_208 = arith.constant 2 : index
      %378 = vector.load %arg7[%c1_206, %c1_207, %c2_208] : memref<2x22x22xf32, #tpu.memory_space<vmem>>, vector<1x16x16xf32>
      %379 = vector.shape_cast %378 : vector<1x16x16xf32> to vector<16x16xf32>
      %380 = vector.broadcast %377 : f32 to vector<16x16xf32>
      %381 = arith.mulf %380, %379 : vector<16x16xf32>
      %382 = arith.addf %376, %381 : vector<16x16xf32>
      %c59 = arith.constant 59 : index
      %383 = memref.load %arg2[%c59] : memref<98xf32, #tpu.memory_space<smem>>
      %c1_209 = arith.constant 1 : index
      %c1_210 = arith.constant 1 : index
      %c3_211 = arith.constant 3 : index
      %384 = vector.load %arg7[%c1_209, %c1_210, %c3_211] : memref<2x22x22xf32, #tpu.memory_space<vmem>>, vector<1x16x16xf32>
      %385 = vector.shape_cast %384 : vector<1x16x16xf32> to vector<16x16xf32>
      %386 = vector.broadcast %383 : f32 to vector<16x16xf32>
      %387 = arith.mulf %386, %385 : vector<16x16xf32>
      %388 = arith.addf %382, %387 : vector<16x16xf32>
      %c60 = arith.constant 60 : index
      %389 = memref.load %arg2[%c60] : memref<98xf32, #tpu.memory_space<smem>>
      %c1_212 = arith.constant 1 : index
      %c1_213 = arith.constant 1 : index
      %c4_214 = arith.constant 4 : index
      %390 = vector.load %arg7[%c1_212, %c1_213, %c4_214] : memref<2x22x22xf32, #tpu.memory_space<vmem>>, vector<1x16x16xf32>
      %391 = vector.shape_cast %390 : vector<1x16x16xf32> to vector<16x16xf32>
      %392 = vector.broadcast %389 : f32 to vector<16x16xf32>
      %393 = arith.mulf %392, %391 : vector<16x16xf32>
      %394 = arith.addf %388, %393 : vector<16x16xf32>
      %c61 = arith.constant 61 : index
      %395 = memref.load %arg2[%c61] : memref<98xf32, #tpu.memory_space<smem>>
      %c1_215 = arith.constant 1 : index
      %c1_216 = arith.constant 1 : index
      %c5_217 = arith.constant 5 : index
      %396 = vector.load %arg7[%c1_215, %c1_216, %c5_217] : memref<2x22x22xf32, #tpu.memory_space<vmem>>, vector<1x16x16xf32>
      %397 = vector.shape_cast %396 : vector<1x16x16xf32> to vector<16x16xf32>
      %398 = vector.broadcast %395 : f32 to vector<16x16xf32>
      %399 = arith.mulf %398, %397 : vector<16x16xf32>
      %400 = arith.addf %394, %399 : vector<16x16xf32>
      %c62 = arith.constant 62 : index
      %401 = memref.load %arg2[%c62] : memref<98xf32, #tpu.memory_space<smem>>
      %c1_218 = arith.constant 1 : index
      %c1_219 = arith.constant 1 : index
      %c6_220 = arith.constant 6 : index
      %402 = vector.load %arg7[%c1_218, %c1_219, %c6_220] : memref<2x22x22xf32, #tpu.memory_space<vmem>>, vector<1x16x16xf32>
      %403 = vector.shape_cast %402 : vector<1x16x16xf32> to vector<16x16xf32>
      %404 = vector.broadcast %401 : f32 to vector<16x16xf32>
      %405 = arith.mulf %404, %403 : vector<16x16xf32>
      %406 = arith.addf %400, %405 : vector<16x16xf32>
      %c63 = arith.constant 63 : index
      %407 = memref.load %arg2[%c63] : memref<98xf32, #tpu.memory_space<smem>>
      %c1_221 = arith.constant 1 : index
      %c2_222 = arith.constant 2 : index
      %c0_223 = arith.constant 0 : index
      %408 = vector.load %arg7[%c1_221, %c2_222, %c0_223] : memref<2x22x22xf32, #tpu.memory_space<vmem>>, vector<1x16x16xf32>
      %409 = vector.shape_cast %408 : vector<1x16x16xf32> to vector<16x16xf32>
      %410 = vector.broadcast %407 : f32 to vector<16x16xf32>
      %411 = arith.mulf %410, %409 : vector<16x16xf32>
      %412 = arith.addf %406, %411 : vector<16x16xf32>
      %c64 = arith.constant 64 : index
      %413 = memref.load %arg2[%c64] : memref<98xf32, #tpu.memory_space<smem>>
      %c1_224 = arith.constant 1 : index
      %c2_225 = arith.constant 2 : index
      %c1_226 = arith.constant 1 : index
      %414 = vector.load %arg7[%c1_224, %c2_225, %c1_226] : memref<2x22x22xf32, #tpu.memory_space<vmem>>, vector<1x16x16xf32>
      %415 = vector.shape_cast %414 : vector<1x16x16xf32> to vector<16x16xf32>
      %416 = vector.broadcast %413 : f32 to vector<16x16xf32>
      %417 = arith.mulf %416, %415 : vector<16x16xf32>
      %418 = arith.addf %412, %417 : vector<16x16xf32>
      %c65 = arith.constant 65 : index
      %419 = memref.load %arg2[%c65] : memref<98xf32, #tpu.memory_space<smem>>
      %c1_227 = arith.constant 1 : index
      %c2_228 = arith.constant 2 : index
      %c2_229 = arith.constant 2 : index
      %420 = vector.load %arg7[%c1_227, %c2_228, %c2_229] : memref<2x22x22xf32, #tpu.memory_space<vmem>>, vector<1x16x16xf32>
      %421 = vector.shape_cast %420 : vector<1x16x16xf32> to vector<16x16xf32>
      %422 = vector.broadcast %419 : f32 to vector<16x16xf32>
      %423 = arith.mulf %422, %421 : vector<16x16xf32>
      %424 = arith.addf %418, %423 : vector<16x16xf32>
      %c66 = arith.constant 66 : index
      %425 = memref.load %arg2[%c66] : memref<98xf32, #tpu.memory_space<smem>>
      %c1_230 = arith.constant 1 : index
      %c2_231 = arith.constant 2 : index
      %c3_232 = arith.constant 3 : index
      %426 = vector.load %arg7[%c1_230, %c2_231, %c3_232] : memref<2x22x22xf32, #tpu.memory_space<vmem>>, vector<1x16x16xf32>
      %427 = vector.shape_cast %426 : vector<1x16x16xf32> to vector<16x16xf32>
      %428 = vector.broadcast %425 : f32 to vector<16x16xf32>
      %429 = arith.mulf %428, %427 : vector<16x16xf32>
      %430 = arith.addf %424, %429 : vector<16x16xf32>
      %c67 = arith.constant 67 : index
      %431 = memref.load %arg2[%c67] : memref<98xf32, #tpu.memory_space<smem>>
      %c1_233 = arith.constant 1 : index
      %c2_234 = arith.constant 2 : index
      %c4_235 = arith.constant 4 : index
      %432 = vector.load %arg7[%c1_233, %c2_234, %c4_235] : memref<2x22x22xf32, #tpu.memory_space<vmem>>, vector<1x16x16xf32>
      %433 = vector.shape_cast %432 : vector<1x16x16xf32> to vector<16x16xf32>
      %434 = vector.broadcast %431 : f32 to vector<16x16xf32>
      %435 = arith.mulf %434, %433 : vector<16x16xf32>
      %436 = arith.addf %430, %435 : vector<16x16xf32>
      %c68 = arith.constant 68 : index
      %437 = memref.load %arg2[%c68] : memref<98xf32, #tpu.memory_space<smem>>
      %c1_236 = arith.constant 1 : index
      %c2_237 = arith.constant 2 : index
      %c5_238 = arith.constant 5 : index
      %438 = vector.load %arg7[%c1_236, %c2_237, %c5_238] : memref<2x22x22xf32, #tpu.memory_space<vmem>>, vector<1x16x16xf32>
      %439 = vector.shape_cast %438 : vector<1x16x16xf32> to vector<16x16xf32>
      %440 = vector.broadcast %437 : f32 to vector<16x16xf32>
      %441 = arith.mulf %440, %439 : vector<16x16xf32>
      %442 = arith.addf %436, %441 : vector<16x16xf32>
      %c69 = arith.constant 69 : index
      %443 = memref.load %arg2[%c69] : memref<98xf32, #tpu.memory_space<smem>>
      %c1_239 = arith.constant 1 : index
      %c2_240 = arith.constant 2 : index
      %c6_241 = arith.constant 6 : index
      %444 = vector.load %arg7[%c1_239, %c2_240, %c6_241] : memref<2x22x22xf32, #tpu.memory_space<vmem>>, vector<1x16x16xf32>
      %445 = vector.shape_cast %444 : vector<1x16x16xf32> to vector<16x16xf32>
      %446 = vector.broadcast %443 : f32 to vector<16x16xf32>
      %447 = arith.mulf %446, %445 : vector<16x16xf32>
      %448 = arith.addf %442, %447 : vector<16x16xf32>
      %c70 = arith.constant 70 : index
      %449 = memref.load %arg2[%c70] : memref<98xf32, #tpu.memory_space<smem>>
      %c1_242 = arith.constant 1 : index
      %c3_243 = arith.constant 3 : index
      %c0_244 = arith.constant 0 : index
      %450 = vector.load %arg7[%c1_242, %c3_243, %c0_244] : memref<2x22x22xf32, #tpu.memory_space<vmem>>, vector<1x16x16xf32>
      %451 = vector.shape_cast %450 : vector<1x16x16xf32> to vector<16x16xf32>
      %452 = vector.broadcast %449 : f32 to vector<16x16xf32>
      %453 = arith.mulf %452, %451 : vector<16x16xf32>
      %454 = arith.addf %448, %453 : vector<16x16xf32>
      %c71 = arith.constant 71 : index
      %455 = memref.load %arg2[%c71] : memref<98xf32, #tpu.memory_space<smem>>
      %c1_245 = arith.constant 1 : index
      %c3_246 = arith.constant 3 : index
      %c1_247 = arith.constant 1 : index
      %456 = vector.load %arg7[%c1_245, %c3_246, %c1_247] : memref<2x22x22xf32, #tpu.memory_space<vmem>>, vector<1x16x16xf32>
      %457 = vector.shape_cast %456 : vector<1x16x16xf32> to vector<16x16xf32>
      %458 = vector.broadcast %455 : f32 to vector<16x16xf32>
      %459 = arith.mulf %458, %457 : vector<16x16xf32>
      %460 = arith.addf %454, %459 : vector<16x16xf32>
      %c72 = arith.constant 72 : index
      %461 = memref.load %arg2[%c72] : memref<98xf32, #tpu.memory_space<smem>>
      %c1_248 = arith.constant 1 : index
      %c3_249 = arith.constant 3 : index
      %c2_250 = arith.constant 2 : index
      %462 = vector.load %arg7[%c1_248, %c3_249, %c2_250] : memref<2x22x22xf32, #tpu.memory_space<vmem>>, vector<1x16x16xf32>
      %463 = vector.shape_cast %462 : vector<1x16x16xf32> to vector<16x16xf32>
      %464 = vector.broadcast %461 : f32 to vector<16x16xf32>
      %465 = arith.mulf %464, %463 : vector<16x16xf32>
      %466 = arith.addf %460, %465 : vector<16x16xf32>
      %c73 = arith.constant 73 : index
      %467 = memref.load %arg2[%c73] : memref<98xf32, #tpu.memory_space<smem>>
      %c1_251 = arith.constant 1 : index
      %c3_252 = arith.constant 3 : index
      %c3_253 = arith.constant 3 : index
      %468 = vector.load %arg7[%c1_251, %c3_252, %c3_253] : memref<2x22x22xf32, #tpu.memory_space<vmem>>, vector<1x16x16xf32>
      %469 = vector.shape_cast %468 : vector<1x16x16xf32> to vector<16x16xf32>
      %470 = vector.broadcast %467 : f32 to vector<16x16xf32>
      %471 = arith.mulf %470, %469 : vector<16x16xf32>
      %472 = arith.addf %466, %471 : vector<16x16xf32>
      %c74 = arith.constant 74 : index
      %473 = memref.load %arg2[%c74] : memref<98xf32, #tpu.memory_space<smem>>
      %c1_254 = arith.constant 1 : index
      %c3_255 = arith.constant 3 : index
      %c4_256 = arith.constant 4 : index
      %474 = vector.load %arg7[%c1_254, %c3_255, %c4_256] : memref<2x22x22xf32, #tpu.memory_space<vmem>>, vector<1x16x16xf32>
      %475 = vector.shape_cast %474 : vector<1x16x16xf32> to vector<16x16xf32>
      %476 = vector.broadcast %473 : f32 to vector<16x16xf32>
      %477 = arith.mulf %476, %475 : vector<16x16xf32>
      %478 = arith.addf %472, %477 : vector<16x16xf32>
      %c75 = arith.constant 75 : index
      %479 = memref.load %arg2[%c75] : memref<98xf32, #tpu.memory_space<smem>>
      %c1_257 = arith.constant 1 : index
      %c3_258 = arith.constant 3 : index
      %c5_259 = arith.constant 5 : index
      %480 = vector.load %arg7[%c1_257, %c3_258, %c5_259] : memref<2x22x22xf32, #tpu.memory_space<vmem>>, vector<1x16x16xf32>
      %481 = vector.shape_cast %480 : vector<1x16x16xf32> to vector<16x16xf32>
      %482 = vector.broadcast %479 : f32 to vector<16x16xf32>
      %483 = arith.mulf %482, %481 : vector<16x16xf32>
      %484 = arith.addf %478, %483 : vector<16x16xf32>
      %c76 = arith.constant 76 : index
      %485 = memref.load %arg2[%c76] : memref<98xf32, #tpu.memory_space<smem>>
      %c1_260 = arith.constant 1 : index
      %c3_261 = arith.constant 3 : index
      %c6_262 = arith.constant 6 : index
      %486 = vector.load %arg7[%c1_260, %c3_261, %c6_262] : memref<2x22x22xf32, #tpu.memory_space<vmem>>, vector<1x16x16xf32>
      %487 = vector.shape_cast %486 : vector<1x16x16xf32> to vector<16x16xf32>
      %488 = vector.broadcast %485 : f32 to vector<16x16xf32>
      %489 = arith.mulf %488, %487 : vector<16x16xf32>
      %490 = arith.addf %484, %489 : vector<16x16xf32>
      %c77 = arith.constant 77 : index
      %491 = memref.load %arg2[%c77] : memref<98xf32, #tpu.memory_space<smem>>
      %c1_263 = arith.constant 1 : index
      %c4_264 = arith.constant 4 : index
      %c0_265 = arith.constant 0 : index
      %492 = vector.load %arg7[%c1_263, %c4_264, %c0_265] : memref<2x22x22xf32, #tpu.memory_space<vmem>>, vector<1x16x16xf32>
      %493 = vector.shape_cast %492 : vector<1x16x16xf32> to vector<16x16xf32>
      %494 = vector.broadcast %491 : f32 to vector<16x16xf32>
      %495 = arith.mulf %494, %493 : vector<16x16xf32>
      %496 = arith.addf %490, %495 : vector<16x16xf32>
      %c78 = arith.constant 78 : index
      %497 = memref.load %arg2[%c78] : memref<98xf32, #tpu.memory_space<smem>>
      %c1_266 = arith.constant 1 : index
      %c4_267 = arith.constant 4 : index
      %c1_268 = arith.constant 1 : index
      %498 = vector.load %arg7[%c1_266, %c4_267, %c1_268] : memref<2x22x22xf32, #tpu.memory_space<vmem>>, vector<1x16x16xf32>
      %499 = vector.shape_cast %498 : vector<1x16x16xf32> to vector<16x16xf32>
      %500 = vector.broadcast %497 : f32 to vector<16x16xf32>
      %501 = arith.mulf %500, %499 : vector<16x16xf32>
      %502 = arith.addf %496, %501 : vector<16x16xf32>
      %c79 = arith.constant 79 : index
      %503 = memref.load %arg2[%c79] : memref<98xf32, #tpu.memory_space<smem>>
      %c1_269 = arith.constant 1 : index
      %c4_270 = arith.constant 4 : index
      %c2_271 = arith.constant 2 : index
      %504 = vector.load %arg7[%c1_269, %c4_270, %c2_271] : memref<2x22x22xf32, #tpu.memory_space<vmem>>, vector<1x16x16xf32>
      %505 = vector.shape_cast %504 : vector<1x16x16xf32> to vector<16x16xf32>
      %506 = vector.broadcast %503 : f32 to vector<16x16xf32>
      %507 = arith.mulf %506, %505 : vector<16x16xf32>
      %508 = arith.addf %502, %507 : vector<16x16xf32>
      %c80 = arith.constant 80 : index
      %509 = memref.load %arg2[%c80] : memref<98xf32, #tpu.memory_space<smem>>
      %c1_272 = arith.constant 1 : index
      %c4_273 = arith.constant 4 : index
      %c3_274 = arith.constant 3 : index
      %510 = vector.load %arg7[%c1_272, %c4_273, %c3_274] : memref<2x22x22xf32, #tpu.memory_space<vmem>>, vector<1x16x16xf32>
      %511 = vector.shape_cast %510 : vector<1x16x16xf32> to vector<16x16xf32>
      %512 = vector.broadcast %509 : f32 to vector<16x16xf32>
      %513 = arith.mulf %512, %511 : vector<16x16xf32>
      %514 = arith.addf %508, %513 : vector<16x16xf32>
      %c81 = arith.constant 81 : index
      %515 = memref.load %arg2[%c81] : memref<98xf32, #tpu.memory_space<smem>>
      %c1_275 = arith.constant 1 : index
      %c4_276 = arith.constant 4 : index
      %c4_277 = arith.constant 4 : index
      %516 = vector.load %arg7[%c1_275, %c4_276, %c4_277] : memref<2x22x22xf32, #tpu.memory_space<vmem>>, vector<1x16x16xf32>
      %517 = vector.shape_cast %516 : vector<1x16x16xf32> to vector<16x16xf32>
      %518 = vector.broadcast %515 : f32 to vector<16x16xf32>
      %519 = arith.mulf %518, %517 : vector<16x16xf32>
      %520 = arith.addf %514, %519 : vector<16x16xf32>
      %c82 = arith.constant 82 : index
      %521 = memref.load %arg2[%c82] : memref<98xf32, #tpu.memory_space<smem>>
      %c1_278 = arith.constant 1 : index
      %c4_279 = arith.constant 4 : index
      %c5_280 = arith.constant 5 : index
      %522 = vector.load %arg7[%c1_278, %c4_279, %c5_280] : memref<2x22x22xf32, #tpu.memory_space<vmem>>, vector<1x16x16xf32>
      %523 = vector.shape_cast %522 : vector<1x16x16xf32> to vector<16x16xf32>
      %524 = vector.broadcast %521 : f32 to vector<16x16xf32>
      %525 = arith.mulf %524, %523 : vector<16x16xf32>
      %526 = arith.addf %520, %525 : vector<16x16xf32>
      %c83 = arith.constant 83 : index
      %527 = memref.load %arg2[%c83] : memref<98xf32, #tpu.memory_space<smem>>
      %c1_281 = arith.constant 1 : index
      %c4_282 = arith.constant 4 : index
      %c6_283 = arith.constant 6 : index
      %528 = vector.load %arg7[%c1_281, %c4_282, %c6_283] : memref<2x22x22xf32, #tpu.memory_space<vmem>>, vector<1x16x16xf32>
      %529 = vector.shape_cast %528 : vector<1x16x16xf32> to vector<16x16xf32>
      %530 = vector.broadcast %527 : f32 to vector<16x16xf32>
      %531 = arith.mulf %530, %529 : vector<16x16xf32>
      %532 = arith.addf %526, %531 : vector<16x16xf32>
      %c84 = arith.constant 84 : index
      %533 = memref.load %arg2[%c84] : memref<98xf32, #tpu.memory_space<smem>>
      %c1_284 = arith.constant 1 : index
      %c5_285 = arith.constant 5 : index
      %c0_286 = arith.constant 0 : index
      %534 = vector.load %arg7[%c1_284, %c5_285, %c0_286] : memref<2x22x22xf32, #tpu.memory_space<vmem>>, vector<1x16x16xf32>
      %535 = vector.shape_cast %534 : vector<1x16x16xf32> to vector<16x16xf32>
      %536 = vector.broadcast %533 : f32 to vector<16x16xf32>
      %537 = arith.mulf %536, %535 : vector<16x16xf32>
      %538 = arith.addf %532, %537 : vector<16x16xf32>
      %c85 = arith.constant 85 : index
      %539 = memref.load %arg2[%c85] : memref<98xf32, #tpu.memory_space<smem>>
      %c1_287 = arith.constant 1 : index
      %c5_288 = arith.constant 5 : index
      %c1_289 = arith.constant 1 : index
      %540 = vector.load %arg7[%c1_287, %c5_288, %c1_289] : memref<2x22x22xf32, #tpu.memory_space<vmem>>, vector<1x16x16xf32>
      %541 = vector.shape_cast %540 : vector<1x16x16xf32> to vector<16x16xf32>
      %542 = vector.broadcast %539 : f32 to vector<16x16xf32>
      %543 = arith.mulf %542, %541 : vector<16x16xf32>
      %544 = arith.addf %538, %543 : vector<16x16xf32>
      %c86 = arith.constant 86 : index
      %545 = memref.load %arg2[%c86] : memref<98xf32, #tpu.memory_space<smem>>
      %c1_290 = arith.constant 1 : index
      %c5_291 = arith.constant 5 : index
      %c2_292 = arith.constant 2 : index
      %546 = vector.load %arg7[%c1_290, %c5_291, %c2_292] : memref<2x22x22xf32, #tpu.memory_space<vmem>>, vector<1x16x16xf32>
      %547 = vector.shape_cast %546 : vector<1x16x16xf32> to vector<16x16xf32>
      %548 = vector.broadcast %545 : f32 to vector<16x16xf32>
      %549 = arith.mulf %548, %547 : vector<16x16xf32>
      %550 = arith.addf %544, %549 : vector<16x16xf32>
      %c87 = arith.constant 87 : index
      %551 = memref.load %arg2[%c87] : memref<98xf32, #tpu.memory_space<smem>>
      %c1_293 = arith.constant 1 : index
      %c5_294 = arith.constant 5 : index
      %c3_295 = arith.constant 3 : index
      %552 = vector.load %arg7[%c1_293, %c5_294, %c3_295] : memref<2x22x22xf32, #tpu.memory_space<vmem>>, vector<1x16x16xf32>
      %553 = vector.shape_cast %552 : vector<1x16x16xf32> to vector<16x16xf32>
      %554 = vector.broadcast %551 : f32 to vector<16x16xf32>
      %555 = arith.mulf %554, %553 : vector<16x16xf32>
      %556 = arith.addf %550, %555 : vector<16x16xf32>
      %c88 = arith.constant 88 : index
      %557 = memref.load %arg2[%c88] : memref<98xf32, #tpu.memory_space<smem>>
      %c1_296 = arith.constant 1 : index
      %c5_297 = arith.constant 5 : index
      %c4_298 = arith.constant 4 : index
      %558 = vector.load %arg7[%c1_296, %c5_297, %c4_298] : memref<2x22x22xf32, #tpu.memory_space<vmem>>, vector<1x16x16xf32>
      %559 = vector.shape_cast %558 : vector<1x16x16xf32> to vector<16x16xf32>
      %560 = vector.broadcast %557 : f32 to vector<16x16xf32>
      %561 = arith.mulf %560, %559 : vector<16x16xf32>
      %562 = arith.addf %556, %561 : vector<16x16xf32>
      %c89 = arith.constant 89 : index
      %563 = memref.load %arg2[%c89] : memref<98xf32, #tpu.memory_space<smem>>
      %c1_299 = arith.constant 1 : index
      %c5_300 = arith.constant 5 : index
      %c5_301 = arith.constant 5 : index
      %564 = vector.load %arg7[%c1_299, %c5_300, %c5_301] : memref<2x22x22xf32, #tpu.memory_space<vmem>>, vector<1x16x16xf32>
      %565 = vector.shape_cast %564 : vector<1x16x16xf32> to vector<16x16xf32>
      %566 = vector.broadcast %563 : f32 to vector<16x16xf32>
      %567 = arith.mulf %566, %565 : vector<16x16xf32>
      %568 = arith.addf %562, %567 : vector<16x16xf32>
      %c90 = arith.constant 90 : index
      %569 = memref.load %arg2[%c90] : memref<98xf32, #tpu.memory_space<smem>>
      %c1_302 = arith.constant 1 : index
      %c5_303 = arith.constant 5 : index
      %c6_304 = arith.constant 6 : index
      %570 = vector.load %arg7[%c1_302, %c5_303, %c6_304] : memref<2x22x22xf32, #tpu.memory_space<vmem>>, vector<1x16x16xf32>
      %571 = vector.shape_cast %570 : vector<1x16x16xf32> to vector<16x16xf32>
      %572 = vector.broadcast %569 : f32 to vector<16x16xf32>
      %573 = arith.mulf %572, %571 : vector<16x16xf32>
      %574 = arith.addf %568, %573 : vector<16x16xf32>
      %c91 = arith.constant 91 : index
      %575 = memref.load %arg2[%c91] : memref<98xf32, #tpu.memory_space<smem>>
      %c1_305 = arith.constant 1 : index
      %c6_306 = arith.constant 6 : index
      %c0_307 = arith.constant 0 : index
      %576 = vector.load %arg7[%c1_305, %c6_306, %c0_307] : memref<2x22x22xf32, #tpu.memory_space<vmem>>, vector<1x16x16xf32>
      %577 = vector.shape_cast %576 : vector<1x16x16xf32> to vector<16x16xf32>
      %578 = vector.broadcast %575 : f32 to vector<16x16xf32>
      %579 = arith.mulf %578, %577 : vector<16x16xf32>
      %580 = arith.addf %574, %579 : vector<16x16xf32>
      %c92 = arith.constant 92 : index
      %581 = memref.load %arg2[%c92] : memref<98xf32, #tpu.memory_space<smem>>
      %c1_308 = arith.constant 1 : index
      %c6_309 = arith.constant 6 : index
      %c1_310 = arith.constant 1 : index
      %582 = vector.load %arg7[%c1_308, %c6_309, %c1_310] : memref<2x22x22xf32, #tpu.memory_space<vmem>>, vector<1x16x16xf32>
      %583 = vector.shape_cast %582 : vector<1x16x16xf32> to vector<16x16xf32>
      %584 = vector.broadcast %581 : f32 to vector<16x16xf32>
      %585 = arith.mulf %584, %583 : vector<16x16xf32>
      %586 = arith.addf %580, %585 : vector<16x16xf32>
      %c93 = arith.constant 93 : index
      %587 = memref.load %arg2[%c93] : memref<98xf32, #tpu.memory_space<smem>>
      %c1_311 = arith.constant 1 : index
      %c6_312 = arith.constant 6 : index
      %c2_313 = arith.constant 2 : index
      %588 = vector.load %arg7[%c1_311, %c6_312, %c2_313] : memref<2x22x22xf32, #tpu.memory_space<vmem>>, vector<1x16x16xf32>
      %589 = vector.shape_cast %588 : vector<1x16x16xf32> to vector<16x16xf32>
      %590 = vector.broadcast %587 : f32 to vector<16x16xf32>
      %591 = arith.mulf %590, %589 : vector<16x16xf32>
      %592 = arith.addf %586, %591 : vector<16x16xf32>
      %c94 = arith.constant 94 : index
      %593 = memref.load %arg2[%c94] : memref<98xf32, #tpu.memory_space<smem>>
      %c1_314 = arith.constant 1 : index
      %c6_315 = arith.constant 6 : index
      %c3_316 = arith.constant 3 : index
      %594 = vector.load %arg7[%c1_314, %c6_315, %c3_316] : memref<2x22x22xf32, #tpu.memory_space<vmem>>, vector<1x16x16xf32>
      %595 = vector.shape_cast %594 : vector<1x16x16xf32> to vector<16x16xf32>
      %596 = vector.broadcast %593 : f32 to vector<16x16xf32>
      %597 = arith.mulf %596, %595 : vector<16x16xf32>
      %598 = arith.addf %592, %597 : vector<16x16xf32>
      %c95 = arith.constant 95 : index
      %599 = memref.load %arg2[%c95] : memref<98xf32, #tpu.memory_space<smem>>
      %c1_317 = arith.constant 1 : index
      %c6_318 = arith.constant 6 : index
      %c4_319 = arith.constant 4 : index
      %600 = vector.load %arg7[%c1_317, %c6_318, %c4_319] : memref<2x22x22xf32, #tpu.memory_space<vmem>>, vector<1x16x16xf32>
      %601 = vector.shape_cast %600 : vector<1x16x16xf32> to vector<16x16xf32>
      %602 = vector.broadcast %599 : f32 to vector<16x16xf32>
      %603 = arith.mulf %602, %601 : vector<16x16xf32>
      %604 = arith.addf %598, %603 : vector<16x16xf32>
      %c96 = arith.constant 96 : index
      %605 = memref.load %arg2[%c96] : memref<98xf32, #tpu.memory_space<smem>>
      %c1_320 = arith.constant 1 : index
      %c6_321 = arith.constant 6 : index
      %c5_322 = arith.constant 5 : index
      %606 = vector.load %arg7[%c1_320, %c6_321, %c5_322] : memref<2x22x22xf32, #tpu.memory_space<vmem>>, vector<1x16x16xf32>
      %607 = vector.shape_cast %606 : vector<1x16x16xf32> to vector<16x16xf32>
      %608 = vector.broadcast %605 : f32 to vector<16x16xf32>
      %609 = arith.mulf %608, %607 : vector<16x16xf32>
      %610 = arith.addf %604, %609 : vector<16x16xf32>
      %c97 = arith.constant 97 : index
      %611 = memref.load %arg2[%c97] : memref<98xf32, #tpu.memory_space<smem>>
      %c1_323 = arith.constant 1 : index
      %c6_324 = arith.constant 6 : index
      %c6_325 = arith.constant 6 : index
      %612 = vector.load %arg7[%c1_323, %c6_324, %c6_325] : memref<2x22x22xf32, #tpu.memory_space<vmem>>, vector<1x16x16xf32>
      %613 = vector.shape_cast %612 : vector<1x16x16xf32> to vector<16x16xf32>
      %614 = vector.broadcast %611 : f32 to vector<16x16xf32>
      %615 = arith.mulf %614, %613 : vector<16x16xf32>
      %616 = arith.addf %610, %615 : vector<16x16xf32>
      %617 = arith.negf %616 : vector<16x16xf32>
      %618 = math.exp %617 : vector<16x16xf32>
      %cst_326 = arith.constant 1.000000e+00 : f32
      %619 = vector.broadcast %cst_326 : f32 to vector<16x16xf32>
      %620 = arith.addf %619, %618 : vector<16x16xf32>
      %621 = arith.divf %619, %620 : vector<16x16xf32>
      %c0_327 = arith.constant 0 : index
      %c0_328 = arith.constant 0 : index
      %c0_329 = arith.constant 0 : index
      %c0_330 = arith.constant 0 : index
      %622 = vector.load %arg4[%c0_327, %c0_328, %c0_329, %c0_330] : memref<1x1x16x16xf32, #tpu.memory_space<vmem>>, vector<1x1x16x16xf32>
      %623 = vector.shape_cast %622 : vector<1x1x16x16xf32> to vector<16x16xf32>
      %624 = vector.shape_cast %621 : vector<16x16xf32> to vector<1x1x16x16xf32>
      tpu.vector_store %arg4[%c0_327, %c0_328, %c0_329, %c0_330], %624 {strides = array<i32>} : memref<1x1x16x16xf32, #tpu.memory_space<vmem>>, vector<1x1x16x16xf32>,
    } else {
    }
    return
  }
  func.func @transform_0(%arg0: i32, %arg1: i32) -> i32 {
    %c0_i32 = arith.constant 0 : i32
    %c0_i32_0 = arith.constant 0 : i32
    return %c0_i32 : i32
  }
  func.func @transform_1(%arg0: i32, %arg1: i32) -> (i32, i32, i32, i32) {
    %c0_i32 = arith.constant 0 : i32
    %c0_i32_0 = arith.constant 0 : i32
    %c0_i32_1 = arith.constant 0 : i32
    return %arg0, %arg1, %c0_i32, %c0_i32_0 : i32, i32, i32, i32
  }
  func.func @transform_2(%arg0: i32, %arg1: i32) -> (i32, i32, i32, i32) {
    %c0_i32 = arith.constant 0 : i32
    %c0_i32_0 = arith.constant 0 : i32
    %c0_i32_1 = arith.constant 0 : i32
    %c0_i32_2 = arith.constant 0 : i32
    return %arg0, %c0_i32, %c0_i32_0, %c0_i32_1 : i32, i32, i32, i32
  }
}

</mosaic_0001>

<llo_original>
// kernel: tpu_custom_call.1
$region0: #{tpu_custom_call.1}
  #allocation0 [shape = 'u32[]', space=smem, size = 0x4, offset = 0x4, fixed_abs, tag = 'smem constant byte address 0x4 - core index']
  #allocation1 [shape = 'u32[144,128]{1,0:T(1,128)}', space=vmem, size = 0x12000, scoped, tag = 'internal scratch']
  #allocation2 [shape = 'f32[16,16]{1,0:T(8,128)}', space=vmem, size = 0x2000, scoped, tag = 'scratch operand']
  #allocation3 [shape = 'f32[16,16]{1,0:T(8,128)}', space=vmem, size = 0x2000, scoped, tag = 'scratch operand']
  #allocation4 [shape = 'f32[2,22,22]{2,1,0:T(8,128)}', space=vmem, size = 0x6000, scoped, tag = 'scratch operand']
  %s0 = inlined_call_operand.hbm [shape: f32[98], index: 0, kind: input, shape index: {}]
  %s1 = inlined_call_operand.hbm [shape: f32[2,4,16,16], index: 1, kind: input, shape index: {}]
  %s2 = inlined_call_operand.hbm [shape: f32[2,1,16,16], index: 2, kind: output, shape index: {}]
  %s3 = sld [smem:[#allocation0]]
  $region57: #{tpu_custom_call.1} parent=0
    _
  %s5 = ssub.s32 1, %s3
  %s6 = scalar_select 0, %s5, %s3
  $region1: #{tpu_custom_call.1} parent=0
    #allocation5 [shape = 'u8[512]{0}', space=smem, size = 0x200, scoped, tag = 'input window, operand 0, single buffered']
    #allocation6 [shape = 's32[2]{0}', space=sflag, size = 0x8, scoped, tag = 'scoped memory for tpu_custom_call.1']
    #allocation7 [shape = 's32[2]{0}', space=sflag, size = 0x8, scoped, tag = 'scoped memory for tpu_custom_call.1']
    #allocation8 [shape = 's32[2]{0}', space=sflag, size = 0x8, scoped, tag = 'scoped memory for tpu_custom_call.1']
    #allocation9 [shape = 'u8[65536]{0}', space=vmem, size = 0x10000, scoped, tag = 'input window, operand 1']
    #allocation10 [shape = 'u8[16384]{0}', space=vmem, size = 0x4000, scoped, tag = 'output window, operand 0']
    %7 = vsyncpa [#allocation8], 0
    %8 = vsyncpa [#allocation6], 0
    %s9 = scalar_lea.sflag [#allocation6], 1
    %10 = vsyncpa %s9, 0
    %11 = vsyncpa [#allocation7], 0
    %s12 = scalar_lea.sflag [#allocation7], 1
    %13 = vsyncpa %s12, 0
    loop: start=0, step=1, limit=4
    $region2: #{tpu_custom_call.1} parent=1 // loop_pre_header
      _
    $region3: #{tpu_custom_call.1} parent=1 // loop_header
      %s15 = sphi 0, %s19
      %p16 = scmp.ge.s32.totalorder %s15, 4
      %s22 = sphi 0, %s34
      %s23 = sphi 0, %s30
      %s24 = sphi 0, %s22
      %s25 = sphi 0, %s23
      %s26 = sphi 0, %s24
      %s27 = sphi 0, %s25
      %s35 = sphi 0, %s35
      %s37 = sphi 0, %s35
      %s38 = sphi 0, %s37
      %s52 = sphi 0, %s38
      %s60 = sphi 0, %s62
      %s63 = sphi 0, %s60
      %s64 = sphi 0, %s63
      %s80 = sphi 0, %s64
      %s86 = sphi 0, %s88
      %s89 = sphi 0, %s86
      %s90 = sphi 0, %s89
      %s106 = sphi 0, %s90
    $region4: #{tpu_custom_call.1} parent=1 // loop_header_branch
      %18 = sbr.rel (%p16) target = $region8
    $region5: #{tpu_custom_call.1} parent=1 // loop_body
      %s20 = ssub.s32 %s15, 1
      %s21 = ssub.s32 %s15, 2
      %s28 = sadd.s32 1, %s23
      %p29 = scmp.ge.s32.totalorder %s28, 1
      %s30 = scalar_select %p29, 0, %s28
      %s31 = sadd.s32 1, %s22
      %s32 = scalar_select %p29, %s31, %s22
      %p33 = scmp.ge.s32.totalorder %s32, 2
      %s34 = scalar_select %p33, 0, %s32
      %s36 = sadd.s32 %s35, 1
      %p39 = scmp.eq.s32.totalorder %s15, 1
      %p40 = scmp.ne.s32.totalorder %s35, %s37
      %p41 = scmp.eq.s32.totalorder %s15, 0
      %p42 = por %p40, %p41
      %p43 = scmp.ne.s32.totalorder %s35, %s37
      %p44 = scmp.eq.s32.totalorder %s20, 1
      %p45 = por %p43, %p44
      %p46 = scmp.ne.s32.totalorder %s37, %s38
      %p47 = scmp.eq.s32.totalorder %s20, 0
      %p48 = por %p46, %p47
      %p49 = scmp.ne.s32.totalorder %s37, %s38
      %p50 = scmp.eq.s32.totalorder %s21, 1
      %p51 = por %p49, %p50
      %p53 = scmp.ne.s32.totalorder %s38, %s52
      %p54 = scmp.eq.s32.totalorder %s21, 0
      %p55 = por %p53, %p54
      %s56 = ssub.s32 %s22, %s34
      %s57 = ssub.s32 %s23, %s30
      %s58 = sor.u32 %s56, %s57
      %p59 = scmp.eq.s32.totalorder %s58, 0
      %s61 = sadd.s32 %s60, 1
      %s62 = scalar_select %p59, %s60, %s61
      %p65 = pneg %p59
      %p66 = scmp.eq.s32.totalorder %s15, 1
      %p67 = por %p65, %p66
      %p68 = scmp.ne.s32.totalorder %s60, %s63
      %p69 = scmp.eq.s32.totalorder %s15, 0
      %p70 = por %p68, %p69
      %p71 = scmp.ne.s32.totalorder %s60, %s63
      %p72 = scmp.eq.s32.totalorder %s20, 1
      %p73 = por %p71, %p72
      %p74 = scmp.ne.s32.totalorder %s63, %s64
      %p75 = scmp.eq.s32.totalorder %s20, 0
      %p76 = por %p74, %p75
      %p77 = scmp.ne.s32.totalorder %s63, %s64
      %p78 = scmp.eq.s32.totalorder %s21, 1
      %p79 = por %p77, %p78
      %p81 = scmp.ne.s32.totalorder %s64, %s80
      %p82 = scmp.eq.s32.totalorder %s21, 0
      %p83 = por %p81, %p82
      %s84 = ssub.s32 %s22, %s34
      %p85 = scmp.eq.s32.totalorder %s84, 0
      %s87 = sadd.s32 %s86, 1
      %s88 = scalar_select %p85, %s86, %s87
      %p91 = pneg %p85
      %p92 = scmp.eq.s32.totalorder %s15, 1
      %p93 = por %p91, %p92
      %p94 = scmp.ne.s32.totalorder %s86, %s89
      %p95 = scmp.eq.s32.totalorder %s15, 0
      %p96 = por %p94, %p95
      %p97 = scmp.ne.s32.totalorder %s86, %s89
      %p98 = scmp.eq.s32.totalorder %s20, 1
      %p99 = por %p97, %p98
      %p100 = scmp.ne.s32.totalorder %s89, %s90
      %p101 = scmp.eq.s32.totalorder %s20, 0
      %p102 = por %p100, %p101
      %p103 = scmp.ne.s32.totalorder %s89, %s90
      %p104 = scmp.eq.s32.totalorder %s21, 1
      %p105 = por %p103, %p104
      %p107 = scmp.ne.s32.totalorder %s90, %s106
      %p108 = scmp.eq.s32.totalorder %s21, 0
      %p109 = por %p107, %p108
      %p110 = scmp.le.s32.totalorder 1, %s15
      %p111 = scmp.lt.s32.totalorder %s15, 3
      %p112 = pnand %p110, %p111
      %p113 = pneg %p112
      // Predicated region
      $region9: #{tpu_custom_call.1} parent=5 // pred_check
        _
      $region10: #{tpu_custom_call.1} parent=5 // pred_check_branch
        %115 = sbr.rel (%p112) target = $region12
      $region11: #{tpu_custom_call.1} parent=5 // pred_region
        %s116 = ssub.s32 %s15, 1
        // Predicated region
        $region13: #{tpu_custom_call.1} parent=11 // pred_check
          %p117 = pneg %p48
        $region14: #{tpu_custom_call.1} parent=11 // pred_check_branch
          %119 = sbr.rel (%p117) target = $region16
        $region15: #{tpu_custom_call.1} parent=11 // pred_region
          %s121 = ssub.s32 16, 16
          %122 = vsyncadd [#allocation8], %s121
          %125 = dma.hbm_to_smem %s0, 16, [#allocation5], [#allocation8]
        $region16: #{tpu_custom_call.1} parent=11 // pred_fallthru
          _
      $region12: #{tpu_custom_call.1} parent=5 // pred_fallthru
        _
      %p126 = scmp.lt.s32.totalorder %s15, 2
      // Predicated region
      $region17: #{tpu_custom_call.1} parent=5 // pred_check
        %p127 = pneg %p126
      $region18: #{tpu_custom_call.1} parent=5 // pred_check_branch
        %129 = sbr.rel (%p127) target = $region20
      $region19: #{tpu_custom_call.1} parent=5 // pred_region
        // Predicated region
        $region21: #{tpu_custom_call.1} parent=19 // pred_check
          %p130 = pneg %p70
        $region22: #{tpu_custom_call.1} parent=19 // pred_check_branch
          %132 = sbr.rel (%p130) target = $region24
        $region23: #{tpu_custom_call.1} parent=19 // pred_region
          %s133 = sand.u32 %s60, 1
          %s134 = scalar_lea.sflag [#allocation6], %s133
          %s135 = sand.u32 %s60, 1
          %s136 = smul.addr %s135, 64
          %s137 = scalar_lea.vmem [#allocation9], %s136
          %s138 = smul.u32 4, %s23
          %s140 = ssub.s32 1024, 1024
          %141 = vsyncadd %s134, %s140
          %s142 = smul.addr %s138, 2
          %s143 = smul.addr %s22, 8
          %s144 = sadd.s32 %s142, %s143
          %s145 = smul.addr %s144, 128
          %s146 = scalar_lea.hbm %s1, %s145
          %s147 = sshll.u32 %s137, 4
          %s148 = int_to_ptr.vmem [resolvable:$true] %s147
          %153 = dma.hbm_to_vmem [thread:$0]  %s146, 1024, %s148, %s134, 128, 128, 8
        $region24: #{tpu_custom_call.1} parent=19 // pred_fallthru
          _
      $region20: #{tpu_custom_call.1} parent=5 // pred_fallthru
        _
      %p154 = scmp.le.s32.totalorder 1, %s15
      %p155 = scmp.lt.s32.totalorder %s15, 3
      %p156 = pnand %p154, %p155
      %p157 = pneg %p156
      // Predicated region
      $region25: #{tpu_custom_call.1} parent=5 // pred_check
        _
      $region26: #{tpu_custom_call.1} parent=5 // pred_check_branch
        %159 = sbr.rel (%p156) target = $region28
      $region27: #{tpu_custom_call.1} parent=5 // pred_region
        %s160 = ssub.s32 %s15, 1
        // Predicated region
        $region29: #{tpu_custom_call.1} parent=27 // pred_check
          %p161 = pneg %p48
        $region30: #{tpu_custom_call.1} parent=27 // pred_check_branch
          %163 = sbr.rel (%p161) target = $region32
        $region31: #{tpu_custom_call.1} parent=27 // pred_region
          %164 = dma.done [#allocation8], 16
        $region32: #{tpu_custom_call.1} parent=27 // pred_fallthru
          _
        %s165 = sand.u32 %s63, 1
        %s166 = scalar_lea.sflag [#allocation6], %s165
        %s167 = sand.u32 %s63, 1
        %s168 = smul.addr %s167, 64
        %s169 = scalar_lea.vmem [#allocation9], %s168
        // Predicated region
        $region33: #{tpu_custom_call.1} parent=27 // pred_check
          %p170 = pneg %p76
        $region34: #{tpu_custom_call.1} parent=27 // pred_check_branch
          %172 = sbr.rel (%p170) target = $region36
        $region35: #{tpu_custom_call.1} parent=27 // pred_region
          %173 = dma.done %s166, 1024
        $region36: #{tpu_custom_call.1} parent=27 // pred_fallthru
          _
        %174 = sfence
        %p175 = pneg %p48
        %p176 = pneg %p45
        %s177 = sand.u32 %s63, 1
        %s178 = scalar_lea.sflag [#allocation6], %s177
        %s179 = sand.u32 %s63, 1
        %s180 = smul.addr %s179, 64
        %s181 = scalar_lea.vmem [#allocation9], %s180
        %p182 = pneg %p76
        %p183 = pneg %p73
        %p184 = pneg %p102
        %p185 = pneg %p99
        %s186 = sand.u32 %s89, 1
        %s187 = scalar_lea.sflag [#allocation7], %s186
        %s188 = sand.u32 %s89, 1
        %s189 = smul.addr %s188, 16
        %s190 = scalar_lea.vmem [#allocation10], %s189
        %s191 = smul.u32 4, %s25
        %v192 = vld [vmem:[%s169] sm:$0xff]
        %v193 = vld [vmem:[%s169 + $0x8] sm:$0xff]
        %v194 = vld [vmem:[%s169 + $0x10] sm:$0xff]
        %v195 = vld [vmem:[%s169 + $0x18] sm:$0xff]
        %v196 = vld [vmem:[%s169 + $0x20] sm:$0xff]
        %v197 = vld [vmem:[%s169 + $0x28] sm:$0xff]
        %v198 = vld [vmem:[%s169 + $0x30] sm:$0xff]
        %v199 = vld [vmem:[%s169 + $0x38] sm:$0xff]
        %vm200 = vcmask 130048
        %v201 = vsel %vm200, %v192, 0.0
        %v202 = vsel %vm200, %v194, 0.0
        %v203 = vadd.f32 %v201, %v202
        %v204 = vsel %vm200, %v196, 0.0
        %v205 = vadd.f32 %v203, %v204
        %v206 = vsel %vm200, %v198, 0.0
        %v207 = vadd.f32 %v205, %v206
        %v208 = vsel %vm200, %v193, 0.0
        %v209 = vsel %vm200, %v195, 0.0
        %v210 = vadd.f32 %v208, %v209
        %v211 = vsel %vm200, %v197, 0.0
        %v212 = vadd.f32 %v210, %v211
        %v213 = vsel %vm200, %v199, 0.0
        %v214 = vadd.f32 %v212, %v213
        %v215 = vsel %vm200, %v192, -inf
        %v216 = vsel %vm200, %v194, -inf
        %v217 = vsel %vm200, %v196, -inf
        %v218 = vmax.f32 %v215, %v217
        %v219 = vsel %vm200, %v198, -inf
        %v220 = vmax.f32 %v216, %v219
        %v221 = vmax.f32 %v218, %v220
        %v222 = vsel %vm200, %v193, -inf
        %v223 = vsel %vm200, %v195, -inf
        %v224 = vsel %vm200, %v197, -inf
        %v225 = vmax.f32 %v222, %v224
        %v226 = vsel %vm200, %v199, -inf
        %v227 = vmax.f32 %v223, %v226
        %v228 = vmax.f32 %v225, %v227
        %p229 = scmp.eq.s32.totalorder %s25, 0
        // Predicated region
        $region37: #{tpu_custom_call.1} parent=27 // pred_check
          %p230 = pneg %p229
        $region38: #{tpu_custom_call.1} parent=27 // pred_check_branch
          %232 = sbr.rel (%p230) target = $region40
        $region39: #{tpu_custom_call.1} parent=27 // pred_region
          %233 = vst.msk [vmem:[#allocation2] sm:$0xff] %vm200, 0.0
          %234 = vst.msk [vmem:[#allocation2 + $0x8] sm:$0xff] %vm200, 0.0
          %235 = vst.msk [vmem:[#allocation3] sm:$0xff] %vm200, -inf
          %236 = vst.msk [vmem:[#allocation3 + $0x8] sm:$0xff] %vm200, -inf
        $region40: #{tpu_custom_call.1} parent=27 // pred_fallthru
          _
        %v237 = vld [vmem:[#allocation2] sm:$0xff]
        %v238 = vld [vmem:[#allocation2 + $0x8] sm:$0xff]
        %v239 = vadd.f32 %v237, %v207
        %v240 = vadd.f32 %v238, %v214
        %241 = vst.msk [vmem:[#allocation2] sm:$0xff] %vm200, %v239
        %242 = vst.msk [vmem:[#allocation2 + $0x8] sm:$0xff] %vm200, %v240
        %v243 = vld [vmem:[#allocation3] sm:$0xff]
        %v244 = vld [vmem:[#allocation3 + $0x8] sm:$0xff]
        %v245 = vmax.f32 %v243, %v221
        %v246 = vmax.f32 %v244, %v228
        %247 = vst.msk [vmem:[#allocation3] sm:$0xff] %vm200, %v245
        %248 = vst.msk [vmem:[#allocation3 + $0x8] sm:$0xff] %vm200, %v246
        // Predicated region
        $region41: #{tpu_custom_call.1} parent=27 // pred_check
          %p249 = pneg %p229
        $region42: #{tpu_custom_call.1} parent=27 // pred_check_branch
          %251 = sbr.rel (%p249) target = $region44
        $region43: #{tpu_custom_call.1} parent=27 // pred_region
          %vm252 = vcmask 179200
          %253 = vst.msk [vmem:[#allocation4] sm:$0xff] %vm252, 0.0
          %254 = vst.msk [vmem:[#allocation4 + $0x8] sm:$0xff] %vm252, 0.0
          %vm255 = vcmask 177152
          %256 = vst.msk [vmem:[#allocation4 + $0x10] sm:$0x3f] %vm255, 0.0
          %257 = vst.msk [vmem:[#allocation4 + $0x18] sm:$0xff] %vm252, 0.0
          %258 = vst.msk [vmem:[#allocation4 + $0x20] sm:$0xff] %vm252, 0.0
          %259 = vst.msk [vmem:[#allocation4 + $0x28] sm:$0x3f] %vm255, 0.0
          %v260 = vld [vmem:[#allocation2] sm:$0xff]
          %v261 = vld [vmem:[#allocation2 + $0x8] sm:$0xff]
          %v262 = vmul.f32 %v260, 0.25
          %v263 = vmul.f32 %v261, 0.25
          %266 = vrot.lane.b32.xlu0 %v262, 3
          %v267 = vpop.permute.xlu0 %266
          %268 = vrot.lane.b32.xlu0 %v263, 3
          %v269 = vpop.permute.xlu0 %268
          %vm272 = vcmask 154648
          %273 = vst.msk [vmem:[#allocation4 + $0x3] sm:$0xff] %vm272, %v267
          %274 = vst.msk [vmem:[#allocation4 + $0xb] sm:$0xff] %vm272, %v269
          %v275 = vld [vmem:[#allocation3] sm:$0xff]
          %v276 = vld [vmem:[#allocation3 + $0x8] sm:$0xff]
          %279 = vrot.lane.b32.xlu0 %v275, 3
          %v280 = vpop.permute.xlu0 %279
          %281 = vrot.lane.b32.xlu0 %v276, 3
          %v282 = vpop.permute.xlu0 %281
          %s285 = scalar_lea.vmem [#allocation4], 24
          %286 = vst.msk [vmem:[%s285 + $0x3] sm:$0xff] %vm272, %v280
          %287 = vst.msk [vmem:[%s285 + $0xb] sm:$0xff] %vm272, %v282
          %s288 = sld [smem:[#allocation5]]
          %v289 = vld [vmem:[#allocation4] sm:$0xff]
          %v290 = vld [vmem:[#allocation4 + $0x8] sm:$0xff]
          %v291 = vstv %s288
          %v292 = vmul.f32 %v291, %v289
          %v293 = vmul.f32 %v291, %v290
          %v294 = vadd.f32 %v292, 0.0
          %v295 = vadd.f32 %v293, 0.0
          %s296 = sld [smem:[#allocation5 + $0x1]]
          %v297 = vstv %s296
          %v298 = vmul.f32 %v297, %v289
          %v299 = vmul.f32 %v297, %v290
          %302 = vrot.lane.b32.xlu0 %v298, 127
          %v303 = vpop.permute.xlu0 %302
          %304 = vrot.lane.b32.xlu0 %v299, 127
          %v305 = vpop.permute.xlu0 %304
          %v308 = vadd.f32 %v294, %v303
          %v309 = vadd.f32 %v295, %v305
          %s310 = sld [smem:[#allocation5 + $0x2]]
          %v311 = vstv %s310
          %v312 = vmul.f32 %v311, %v289
          %v313 = vmul.f32 %v311, %v290
          %316 = vrot.lane.b32.xlu0 %v312, 126
          %v317 = vpop.permute.xlu0 %316
          %318 = vrot.lane.b32.xlu0 %v313, 126
          %v319 = vpop.permute.xlu0 %318
          %v322 = vadd.f32 %v308, %v317
          %v323 = vadd.f32 %v309, %v319
          %s324 = sld [smem:[#allocation5 + $0x3]]
          %v325 = vstv %s324
          %v326 = vmul.f32 %v325, %v289
          %v327 = vmul.f32 %v325, %v290
          %330 = vrot.lane.b32.xlu0 %v326, 125
          %v331 = vpop.permute.xlu0 %330
          %332 = vrot.lane.b32.xlu0 %v327, 125
          %v333 = vpop.permute.xlu0 %332
          %v336 = vadd.f32 %v322, %v331
          %v337 = vadd.f32 %v323, %v333
          %s338 = sld [smem:[#allocation5 + $0x4]]
          %v339 = vstv %s338
          %v340 = vmul.f32 %v339, %v289
          %v341 = vmul.f32 %v339, %v290
          %344 = vrot.lane.b32.xlu0 %v340, 124
          %v345 = vpop.permute.xlu0 %344
          %346 = vrot.lane.b32.xlu0 %v341, 124
          %v347 = vpop.permute.xlu0 %346
          %v350 = vadd.f32 %v336, %v345
          %v351 = vadd.f32 %v337, %v347
          %s352 = sld [smem:[#allocation5 + $0x5]]
          %v353 = vstv %s352
          %v354 = vmul.f32 %v353, %v289
          %v355 = vmul.f32 %v353, %v290
          %358 = vrot.lane.b32.xlu0 %v354, 123
          %v359 = vpop.permute.xlu0 %358
          %360 = vrot.lane.b32.xlu0 %v355, 123
          %v361 = vpop.permute.xlu0 %360
          %v364 = vadd.f32 %v350, %v359
          %v365 = vadd.f32 %v351, %v361
          %s366 = sld [smem:[#allocation5 + $0x6]]
          %v367 = vstv %s366
          %v368 = vmul.f32 %v367, %v289
          %v369 = vmul.f32 %v367, %v290
          %372 = vrot.lane.b32.xlu0 %v368, 122
          %v373 = vpop.permute.xlu0 %372
          %374 = vrot.lane.b32.xlu0 %v369, 122
          %v375 = vpop.permute.xlu0 %374
          %v378 = vadd.f32 %v364, %v373
          %v379 = vadd.f32 %v365, %v375
          %s380 = sld [smem:[#allocation5 + $0x7]]
          %v381 = vld [vmem:[#allocation4 + $0x1] sm:$0xff]
          %v382 = vld [vmem:[#allocation4 + $0x9] sm:$0xff]
          %v383 = vstv %s380
          %v384 = vmul.f32 %v383, %v381
          %v385 = vmul.f32 %v383, %v382
          %v386 = vadd.f32 %v378, %v384
          %v387 = vadd.f32 %v379, %v385
          %s388 = sld [smem:[#allocation5 + $0x8]]
          %v389 = vstv %s388
          %v390 = vmul.f32 %v389, %v381
          %v391 = vmul.f32 %v389, %v382
          %394 = vrot.lane.b32.xlu0 %v390, 127
          %v395 = vpop.permute.xlu0 %394
          %396 = vrot.lane.b32.xlu0 %v391, 127
          %v397 = vpop.permute.xlu0 %396
          %v400 = vadd.f32 %v386, %v395
          %v401 = vadd.f32 %v387, %v397
          %s402 = sld [smem:[#allocation5 + $0x9]]
          %v403 = vstv %s402
          %v404 = vmul.f32 %v403, %v381
          %v405 = vmul.f32 %v403, %v382
          %408 = vrot.lane.b32.xlu0 %v404, 126
          %v409 = vpop.permute.xlu0 %408
          %410 = vrot.lane.b32.xlu0 %v405, 126
          %v411 = vpop.permute.xlu0 %410
          %v414 = vadd.f32 %v400, %v409
          %v415 = vadd.f32 %v401, %v411
          %s416 = sld [smem:[#allocation5 + $0xa]]
          %v417 = vstv %s416
          %v418 = vmul.f32 %v417, %v381
          %v419 = vmul.f32 %v417, %v382
          %422 = vrot.lane.b32.xlu0 %v418, 125
          %v423 = vpop.permute.xlu0 %422
          %424 = vrot.lane.b32.xlu0 %v419, 125
          %v425 = vpop.permute.xlu0 %424
          %v428 = vadd.f32 %v414, %v423
          %v429 = vadd.f32 %v415, %v425
          %s430 = sld [smem:[#allocation5 + $0xb]]
          %v431 = vstv %s430
          %v432 = vmul.f32 %v431, %v381
          %v433 = vmul.f32 %v431, %v382
          %436 = vrot.lane.b32.xlu0 %v432, 124
          %v437 = vpop.permute.xlu0 %436
          %438 = vrot.lane.b32.xlu0 %v433, 124
          %v439 = vpop.permute.xlu0 %438
          %v442 = vadd.f32 %v428, %v437
          %v443 = vadd.f32 %v429, %v439
          %s444 = sld [smem:[#allocation5 + $0xc]]
          %v445 = vstv %s444
          %v446 = vmul.f32 %v445, %v381
          %v447 = vmul.f32 %v445, %v382
          %450 = vrot.lane.b32.xlu0 %v446, 123
          %v451 = vpop.permute.xlu0 %450
          %452 = vrot.lane.b32.xlu0 %v447, 123
          %v453 = vpop.permute.xlu0 %452
          %v456 = vadd.f32 %v442, %v451
          %v457 = vadd.f32 %v443, %v453
          %s458 = sld [smem:[#allocation5 + $0xd]]
          %v459 = vstv %s458
          %v460 = vmul.f32 %v459, %v381
          %v461 = vmul.f32 %v459, %v382
          %464 = vrot.lane.b32.xlu0 %v460, 122
          %v465 = vpop.permute.xlu0 %464
          %466 = vrot.lane.b32.xlu0 %v461, 122
          %v467 = vpop.permute.xlu0 %466
          %v470 = vadd.f32 %v456, %v465
          %v471 = vadd.f32 %v457, %v467
          %s472 = sld [smem:[#allocation5 + $0xe]]
          %v473 = vld [vmem:[#allocation4 + $0x2] sm:$0xff]
          %v474 = vld [vmem:[#allocation4 + $0xa] sm:$0xff]
          %v475 = vstv %s472
          %v476 = vmul.f32 %v475, %v473
          %v477 = vmul.f32 %v475, %v474
          %v478 = vadd.f32 %v470, %v476
          %v479 = vadd.f32 %v471, %v477
          %s480 = sld [smem:[#allocation5 + $0xf]]
          %v481 = vstv %s480
          %v482 = vmul.f32 %v481, %v473
          %v483 = vmul.f32 %v481, %v474
          %486 = vrot.lane.b32.xlu0 %v482, 127
          %v487 = vpop.permute.xlu0 %486
          %488 = vrot.lane.b32.xlu0 %v483, 127
          %v489 = vpop.permute.xlu0 %488
          %v492 = vadd.f32 %v478, %v487
          %v493 = vadd.f32 %v479, %v489
          %s494 = sld [smem:[#allocation5 + $0x10]]
          %v495 = vstv %s494
          %v496 = vmul.f32 %v495, %v473
          %v497 = vmul.f32 %v495, %v474
          %500 = vrot.lane.b32.xlu0 %v496, 126
          %v501 = vpop.permute.xlu0 %500
          %502 = vrot.lane.b32.xlu0 %v497, 126
          %v503 = vpop.permute.xlu0 %502
          %v506 = vadd.f32 %v492, %v501
          %v507 = vadd.f32 %v493, %v503
          %s508 = sld [smem:[#allocation5 + $0x11]]
          %v509 = vstv %s508
          %v510 = vmul.f32 %v509, %v473
          %v511 = vmul.f32 %v509, %v474
          %514 = vrot.lane.b32.xlu0 %v510, 125
          %v515 = vpop.permute.xlu0 %514
          %516 = vrot.lane.b32.xlu0 %v511, 125
          %v517 = vpop.permute.xlu0 %516
          %v520 = vadd.f32 %v506, %v515
          %v521 = vadd.f32 %v507, %v517
          %s522 = sld [smem:[#allocation5 + $0x12]]
          %v523 = vstv %s522
          %v524 = vmul.f32 %v523, %v473
          %v525 = vmul.f32 %v523, %v474
          %528 = vrot.lane.b32.xlu0 %v524, 124
          %v529 = vpop.permute.xlu0 %528
          %530 = vrot.lane.b32.xlu0 %v525, 124
          %v531 = vpop.permute.xlu0 %530
          %v534 = vadd.f32 %v520, %v529
          %v535 = vadd.f32 %v521, %v531
          %s536 = sld [smem:[#allocation5 + $0x13]]
          %v537 = vstv %s536
          %v538 = vmul.f32 %v537, %v473
          %v539 = vmul.f32 %v537, %v474
          %542 = vrot.lane.b32.xlu0 %v538, 123
          %v543 = vpop.permute.xlu0 %542
          %544 = vrot.lane.b32.xlu0 %v539, 123
          %v545 = vpop.permute.xlu0 %544
          %v548 = vadd.f32 %v534, %v543
          %v549 = vadd.f32 %v535, %v545
          %s550 = sld [smem:[#allocation5 + $0x14]]
          %v551 = vstv %s550
          %v552 = vmul.f32 %v551, %v473
          %v553 = vmul.f32 %v551, %v474
          %556 = vrot.lane.b32.xlu0 %v552, 122
          %v557 = vpop.permute.xlu0 %556
          %558 = vrot.lane.b32.xlu0 %v553, 122
          %v559 = vpop.permute.xlu0 %558
          %v562 = vadd.f32 %v548, %v557
          %v563 = vadd.f32 %v549, %v559
          %s564 = sld [smem:[#allocation5 + $0x15]]
          %v565 = vld [vmem:[#allocation4 + $0x3] sm:$0xff]
          %v566 = vld [vmem:[#allocation4 + $0xb] sm:$0xff]
          %v567 = vstv %s564
          %v568 = vmul.f32 %v567, %v565
          %v569 = vmul.f32 %v567, %v566
          %v570 = vadd.f32 %v562, %v568
          %v571 = vadd.f32 %v563, %v569
          %s572 = sld [smem:[#allocation5 + $0x16]]
          %v573 = vstv %s572
          %v574 = vmul.f32 %v573, %v565
          %v575 = vmul.f32 %v573, %v566
          %578 = vrot.lane.b32.xlu0 %v574, 127
          %v579 = vpop.permute.xlu0 %578
          %580 = vrot.lane.b32.xlu0 %v575, 127
          %v581 = vpop.permute.xlu0 %580
          %v584 = vadd.f32 %v570, %v579
          %v585 = vadd.f32 %v571, %v581
          %s586 = sld [smem:[#allocation5 + $0x17]]
          %v587 = vstv %s586
          %v588 = vmul.f32 %v587, %v565
          %v589 = vmul.f32 %v587, %v566
          %592 = vrot.lane.b32.xlu0 %v588, 126
          %v593 = vpop.permute.xlu0 %592
          %594 = vrot.lane.b32.xlu0 %v589, 126
          %v595 = vpop.permute.xlu0 %594
          %v598 = vadd.f32 %v584, %v593
          %v599 = vadd.f32 %v585, %v595
          %s600 = sld [smem:[#allocation5 + $0x18]]
          %v601 = vstv %s600
          %v602 = vmul.f32 %v601, %v565
          %v603 = vmul.f32 %v601, %v566
          %606 = vrot.lane.b32.xlu0 %v602, 125
          %v607 = vpop.permute.xlu0 %606
          %608 = vrot.lane.b32.xlu0 %v603, 125
          %v609 = vpop.permute.xlu0 %608
          %v612 = vadd.f32 %v598, %v607
          %v613 = vadd.f32 %v599, %v609
          %s614 = sld [smem:[#allocation5 + $0x19]]
          %v615 = vstv %s614
          %v616 = vmul.f32 %v615, %v565
          %v617 = vmul.f32 %v615, %v566
          %620 = vrot.lane.b32.xlu0 %v616, 124
          %v621 = vpop.permute.xlu0 %620
          %622 = vrot.lane.b32.xlu0 %v617, 124
          %v623 = vpop.permute.xlu0 %622
          %v626 = vadd.f32 %v612, %v621
          %v627 = vadd.f32 %v613, %v623
          %s628 = sld [smem:[#allocation5 + $0x1a]]
          %v629 = vstv %s628
          %v630 = vmul.f32 %v629, %v565
          %v631 = vmul.f32 %v629, %v566
          %634 = vrot.lane.b32.xlu0 %v630, 123
          %v635 = vpop.permute.xlu0 %634
          %636 = vrot.lane.b32.xlu0 %v631, 123
          %v637 = vpop.permute.xlu0 %636
          %v640 = vadd.f32 %v626, %v635
          %v641 = vadd.f32 %v627, %v637
          %s642 = sld [smem:[#allocation5 + $0x1b]]
          %v643 = vstv %s642
          %v644 = vmul.f32 %v643, %v565
          %v645 = vmul.f32 %v643, %v566
          %648 = vrot.lane.b32.xlu0 %v644, 122
          %v649 = vpop.permute.xlu0 %648
          %650 = vrot.lane.b32.xlu0 %v645, 122
          %v651 = vpop.permute.xlu0 %650
          %v654 = vadd.f32 %v640, %v649
          %v655 = vadd.f32 %v641, %v651
          %s656 = sld [smem:[#allocation5 + $0x1c]]
          %v657 = vld [vmem:[#allocation4 + $0x4] sm:$0xff]
          %v658 = vld [vmem:[#allocation4 + $0xc] sm:$0xff]
          %v659 = vstv %s656
          %v660 = vmul.f32 %v659, %v657
          %v661 = vmul.f32 %v659, %v658
          %v662 = vadd.f32 %v654, %v660
          %v663 = vadd.f32 %v655, %v661
          %s664 = sld [smem:[#allocation5 + $0x1d]]
          %v665 = vstv %s664
          %v666 = vmul.f32 %v665, %v657
          %v667 = vmul.f32 %v665, %v658
          %670 = vrot.lane.b32.xlu0 %v666, 127
          %v671 = vpop.permute.xlu0 %670
          %672 = vrot.lane.b32.xlu0 %v667, 127
          %v673 = vpop.permute.xlu0 %672
          %v676 = vadd.f32 %v662, %v671
          %v677 = vadd.f32 %v663, %v673
          %s678 = sld [smem:[#allocation5 + $0x1e]]
          %v679 = vstv %s678
          %v680 = vmul.f32 %v679, %v657
          %v681 = vmul.f32 %v679, %v658
          %684 = vrot.lane.b32.xlu0 %v680, 126
          %v685 = vpop.permute.xlu0 %684
          %686 = vrot.lane.b32.xlu0 %v681, 126
          %v687 = vpop.permute.xlu0 %686
          %v690 = vadd.f32 %v676, %v685
          %v691 = vadd.f32 %v677, %v687
          %s692 = sld [smem:[#allocation5 + $0x1f]]
          %v693 = vstv %s692
          %v694 = vmul.f32 %v693, %v657
          %v695 = vmul.f32 %v693, %v658
          %698 = vrot.lane.b32.xlu0 %v694, 125
          %v699 = vpop.permute.xlu0 %698
          %700 = vrot.lane.b32.xlu0 %v695, 125
          %v701 = vpop.permute.xlu0 %700
          %v704 = vadd.f32 %v690, %v699
          %v705 = vadd.f32 %v691, %v701
          %s706 = sld [smem:[#allocation5 + $0x20]]
          %v707 = vstv %s706
          %v708 = vmul.f32 %v707, %v657
          %v709 = vmul.f32 %v707, %v658
          %712 = vrot.lane.b32.xlu0 %v708, 124
          %v713 = vpop.permute.xlu0 %712
          %714 = vrot.lane.b32.xlu0 %v709, 124
          %v715 = vpop.permute.xlu0 %714
          %v718 = vadd.f32 %v704, %v713
          %v719 = vadd.f32 %v705, %v715
          %s720 = sld [smem:[#allocation5 + $0x21]]
          %v721 = vstv %s720
          %v722 = vmul.f32 %v721, %v657
          %v723 = vmul.f32 %v721, %v658
          %726 = vrot.lane.b32.xlu0 %v722, 123
          %v727 = vpop.permute.xlu0 %726
          %728 = vrot.lane.b32.xlu0 %v723, 123
          %v729 = vpop.permute.xlu0 %728
          %v732 = vadd.f32 %v718, %v727
          %v733 = vadd.f32 %v719, %v729
          %s734 = sld [smem:[#allocation5 + $0x22]]
          %v735 = vstv %s734
          %v736 = vmul.f32 %v735, %v657
          %v737 = vmul.f32 %v735, %v658
          %740 = vrot.lane.b32.xlu0 %v736, 122
          %v741 = vpop.permute.xlu0 %740
          %742 = vrot.lane.b32.xlu0 %v737, 122
          %v743 = vpop.permute.xlu0 %742
          %v746 = vadd.f32 %v732, %v741
          %v747 = vadd.f32 %v733, %v743
          %s748 = sld [smem:[#allocation5 + $0x23]]
          %v749 = vld [vmem:[#allocation4 + $0x5] sm:$0xff]
          %v750 = vld [vmem:[#allocation4 + $0xd] sm:$0xff]
          %v751 = vstv %s748
          %v752 = vmul.f32 %v751, %v749
          %v753 = vmul.f32 %v751, %v750
          %v754 = vadd.f32 %v746, %v752
          %v755 = vadd.f32 %v747, %v753
          %s756 = sld [smem:[#allocation5 + $0x24]]
          %v757 = vstv %s756
          %v758 = vmul.f32 %v757, %v749
          %v759 = vmul.f32 %v757, %v750
          %762 = vrot.lane.b32.xlu0 %v758, 127
          %v763 = vpop.permute.xlu0 %762
          %764 = vrot.lane.b32.xlu0 %v759, 127
          %v765 = vpop.permute.xlu0 %764
          %v768 = vadd.f32 %v754, %v763
          %v769 = vadd.f32 %v755, %v765
          %s770 = sld [smem:[#allocation5 + $0x25]]
          %v771 = vstv %s770
          %v772 = vmul.f32 %v771, %v749
          %v773 = vmul.f32 %v771, %v750
          %776 = vrot.lane.b32.xlu0 %v772, 126
          %v777 = vpop.permute.xlu0 %776
          %778 = vrot.lane.b32.xlu0 %v773, 126
          %v779 = vpop.permute.xlu0 %778
          %v782 = vadd.f32 %v768, %v777
          %v783 = vadd.f32 %v769, %v779
          %s784 = sld [smem:[#allocation5 + $0x26]]
          %v785 = vstv %s784
          %v786 = vmul.f32 %v785, %v749
          %v787 = vmul.f32 %v785, %v750
          %790 = vrot.lane.b32.xlu0 %v786, 125
          %v791 = vpop.permute.xlu0 %790
          %792 = vrot.lane.b32.xlu0 %v787, 125
          %v793 = vpop.permute.xlu0 %792
          %v796 = vadd.f32 %v782, %v791
          %v797 = vadd.f32 %v783, %v793
          %s798 = sld [smem:[#allocation5 + $0x27]]
          %v799 = vstv %s798
          %v800 = vmul.f32 %v799, %v749
          %v801 = vmul.f32 %v799, %v750
          %804 = vrot.lane.b32.xlu0 %v800, 124
          %v805 = vpop.permute.xlu0 %804
          %806 = vrot.lane.b32.xlu0 %v801, 124
          %v807 = vpop.permute.xlu0 %806
          %v810 = vadd.f32 %v796, %v805
          %v811 = vadd.f32 %v797, %v807
          %s812 = sld [smem:[#allocation5 + $0x28]]
          %v813 = vstv %s812
          %v814 = vmul.f32 %v813, %v749
          %v815 = vmul.f32 %v813, %v750
          %818 = vrot.lane.b32.xlu0 %v814, 123
          %v819 = vpop.permute.xlu0 %818
          %820 = vrot.lane.b32.xlu0 %v815, 123
          %v821 = vpop.permute.xlu0 %820
          %v824 = vadd.f32 %v810, %v819
          %v825 = vadd.f32 %v811, %v821
          %s826 = sld [smem:[#allocation5 + $0x29]]
          %v827 = vstv %s826
          %v828 = vmul.f32 %v827, %v749
          %v829 = vmul.f32 %v827, %v750
          %832 = vrot.lane.b32.xlu0 %v828, 122
          %v833 = vpop.permute.xlu0 %832
          %834 = vrot.lane.b32.xlu0 %v829, 122
          %v835 = vpop.permute.xlu0 %834
          %v838 = vadd.f32 %v824, %v833
          %v839 = vadd.f32 %v825, %v835
          %s840 = sld [smem:[#allocation5 + $0x2a]]
          %v841 = vld [vmem:[#allocation4 + $0x6] sm:$0xff]
          %v842 = vld [vmem:[#allocation4 + $0xe] sm:$0xff]
          %v843 = vstv %s840
          %v844 = vmul.f32 %v843, %v841
          %v845 = vmul.f32 %v843, %v842
          %v846 = vadd.f32 %v838, %v844
          %v847 = vadd.f32 %v839, %v845
          %s848 = sld [smem:[#allocation5 + $0x2b]]
          %v849 = vstv %s848
          %v850 = vmul.f32 %v849, %v841
          %v851 = vmul.f32 %v849, %v842
          %854 = vrot.lane.b32.xlu0 %v850, 127
          %v855 = vpop.permute.xlu0 %854
          %856 = vrot.lane.b32.xlu0 %v851, 127
          %v857 = vpop.permute.xlu0 %856
          %v860 = vadd.f32 %v846, %v855
          %v861 = vadd.f32 %v847, %v857
          %s862 = sld [smem:[#allocation5 + $0x2c]]
          %v863 = vstv %s862
          %v864 = vmul.f32 %v863, %v841
          %v865 = vmul.f32 %v863, %v842
          %868 = vrot.lane.b32.xlu0 %v864, 126
          %v869 = vpop.permute.xlu0 %868
          %870 = vrot.lane.b32.xlu0 %v865, 126
          %v871 = vpop.permute.xlu0 %870
          %v874 = vadd.f32 %v860, %v869
          %v875 = vadd.f32 %v861, %v871
          %s876 = sld [smem:[#allocation5 + $0x2d]]
          %v877 = vstv %s876
          %v878 = vmul.f32 %v877, %v841
          %v879 = vmul.f32 %v877, %v842
          %882 = vrot.lane.b32.xlu0 %v878, 125
          %v883 = vpop.permute.xlu0 %882
          %884 = vrot.lane.b32.xlu0 %v879, 125
          %v885 = vpop.permute.xlu0 %884
          %v888 = vadd.f32 %v874, %v883
          %v889 = vadd.f32 %v875, %v885
          %s890 = sld [smem:[#allocation5 + $0x2e]]
          %v891 = vstv %s890
          %v892 = vmul.f32 %v891, %v841
          %v893 = vmul.f32 %v891, %v842
          %896 = vrot.lane.b32.xlu0 %v892, 124
          %v897 = vpop.permute.xlu0 %896
          %898 = vrot.lane.b32.xlu0 %v893, 124
          %v899 = vpop.permute.xlu0 %898
          %v902 = vadd.f32 %v888, %v897
          %v903 = vadd.f32 %v889, %v899
          %s904 = sld [smem:[#allocation5 + $0x2f]]
          %v905 = vstv %s904
          %v906 = vmul.f32 %v905, %v841
          %v907 = vmul.f32 %v905, %v842
          %910 = vrot.lane.b32.xlu0 %v906, 123
          %v911 = vpop.permute.xlu0 %910
          %912 = vrot.lane.b32.xlu0 %v907, 123
          %v913 = vpop.permute.xlu0 %912
          %v916 = vadd.f32 %v902, %v911
          %v917 = vadd.f32 %v903, %v913
          %s918 = sld [smem:[#allocation5 + $0x30]]
          %v919 = vstv %s918
          %v920 = vmul.f32 %v919, %v841
          %v921 = vmul.f32 %v919, %v842
          %924 = vrot.lane.b32.xlu0 %v920, 122
          %v925 = vpop.permute.xlu0 %924
          %926 = vrot.lane.b32.xlu0 %v921, 122
          %v927 = vpop.permute.xlu0 %926
          %v930 = vadd.f32 %v916, %v925
          %v931 = vadd.f32 %v917, %v927
          %s932 = sld [smem:[#allocation5 + $0x31]]
          %v933 = vld [vmem:[%s285] sm:$0xff]
          %v934 = vld [vmem:[%s285 + $0x8] sm:$0xff]
          %v935 = vstv %s932
          %v936 = vmul.f32 %v935, %v933
          %v937 = vmul.f32 %v935, %v934
          %v938 = vadd.f32 %v930, %v936
          %v939 = vadd.f32 %v931, %v937
          %s940 = sld [smem:[#allocation5 + $0x32]]
          %v941 = vstv %s940
          %v942 = vmul.f32 %v941, %v933
          %v943 = vmul.f32 %v941, %v934
          %946 = vrot.lane.b32.xlu0 %v942, 127
          %v947 = vpop.permute.xlu0 %946
          %948 = vrot.lane.b32.xlu0 %v943, 127
          %v949 = vpop.permute.xlu0 %948
          %v952 = vadd.f32 %v938, %v947
          %v953 = vadd.f32 %v939, %v949
          %s954 = sld [smem:[#allocation5 + $0x33]]
          %v955 = vstv %s954
          %v956 = vmul.f32 %v955, %v933
          %v957 = vmul.f32 %v955, %v934
          %960 = vrot.lane.b32.xlu0 %v956, 126
          %v961 = vpop.permute.xlu0 %960
          %962 = vrot.lane.b32.xlu0 %v957, 126
          %v963 = vpop.permute.xlu0 %962
          %v966 = vadd.f32 %v952, %v961
          %v967 = vadd.f32 %v953, %v963
          %s968 = sld [smem:[#allocation5 + $0x34]]
          %v969 = vstv %s968
          %v970 = vmul.f32 %v969, %v933
          %v971 = vmul.f32 %v969, %v934
          %974 = vrot.lane.b32.xlu0 %v970, 125
          %v975 = vpop.permute.xlu0 %974
          %976 = vrot.lane.b32.xlu0 %v971, 125
          %v977 = vpop.permute.xlu0 %976
          %v980 = vadd.f32 %v966, %v975
          %v981 = vadd.f32 %v967, %v977
          %s982 = sld [smem:[#allocation5 + $0x35]]
          %v983 = vstv %s982
          %v984 = vmul.f32 %v983, %v933
          %v985 = vmul.f32 %v983, %v934
          %988 = vrot.lane.b32.xlu0 %v984, 124
          %v989 = vpop.permute.xlu0 %988
          %990 = vrot.lane.b32.xlu0 %v985, 124
          %v991 = vpop.permute.xlu0 %990
          %v994 = vadd.f32 %v980, %v989
          %v995 = vadd.f32 %v981, %v991
          %s996 = sld [smem:[#allocation5 + $0x36]]
          %v997 = vstv %s996
          %v998 = vmul.f32 %v997, %v933
          %v999 = vmul.f32 %v997, %v934
          %1002 = vrot.lane.b32.xlu0 %v998, 123
          %v1003 = vpop.permute.xlu0 %1002
          %1004 = vrot.lane.b32.xlu0 %v999, 123
          %v1005 = vpop.permute.xlu0 %1004
          %v1008 = vadd.f32 %v994, %v1003
          %v1009 = vadd.f32 %v995, %v1005
          %s1010 = sld [smem:[#allocation5 + $0x37]]
          %v1011 = vstv %s1010
          %v1012 = vmul.f32 %v1011, %v933
          %v1013 = vmul.f32 %v1011, %v934
          %1016 = vrot.lane.b32.xlu0 %v1012, 122
          %v1017 = vpop.permute.xlu0 %1016
          %1018 = vrot.lane.b32.xlu0 %v1013, 122
          %v1019 = vpop.permute.xlu0 %1018
          %v1022 = vadd.f32 %v1008, %v1017
          %v1023 = vadd.f32 %v1009, %v1019
          %s1024 = sld [smem:[#allocation5 + $0x38]]
          %v1025 = vld [vmem:[%s285 + $0x1] sm:$0xff]
          %v1026 = vld [vmem:[%s285 + $0x9] sm:$0xff]
          %v1027 = vstv %s1024
          %v1028 = vmul.f32 %v1027, %v1025
          %v1029 = vmul.f32 %v1027, %v1026
          %v1030 = vadd.f32 %v1022, %v1028
          %v1031 = vadd.f32 %v1023, %v1029
          %s1032 = sld [smem:[#allocation5 + $0x39]]
          %v1033 = vstv %s1032
          %v1034 = vmul.f32 %v1033, %v1025
          %v1035 = vmul.f32 %v1033, %v1026
          %1038 = vrot.lane.b32.xlu0 %v1034, 127
          %v1039 = vpop.permute.xlu0 %1038
          %1040 = vrot.lane.b32.xlu0 %v1035, 127
          %v1041 = vpop.permute.xlu0 %1040
          %v1044 = vadd.f32 %v1030, %v1039
          %v1045 = vadd.f32 %v1031, %v1041
          %s1046 = sld [smem:[#allocation5 + $0x3a]]
          %v1047 = vstv %s1046
          %v1048 = vmul.f32 %v1047, %v1025
          %v1049 = vmul.f32 %v1047, %v1026
          %1052 = vrot.lane.b32.xlu0 %v1048, 126
          %v1053 = vpop.permute.xlu0 %1052
          %1054 = vrot.lane.b32.xlu0 %v1049, 126
          %v1055 = vpop.permute.xlu0 %1054
          %v1058 = vadd.f32 %v1044, %v1053
          %v1059 = vadd.f32 %v1045, %v1055
          %s1060 = sld [smem:[#allocation5 + $0x3b]]
          %v1061 = vstv %s1060
          %v1062 = vmul.f32 %v1061, %v1025
          %v1063 = vmul.f32 %v1061, %v1026
          %1066 = vrot.lane.b32.xlu0 %v1062, 125
          %v1067 = vpop.permute.xlu0 %1066
          %1068 = vrot.lane.b32.xlu0 %v1063, 125
          %v1069 = vpop.permute.xlu0 %1068
          %v1072 = vadd.f32 %v1058, %v1067
          %v1073 = vadd.f32 %v1059, %v1069
          %s1074 = sld [smem:[#allocation5 + $0x3c]]
          %v1075 = vstv %s1074
          %v1076 = vmul.f32 %v1075, %v1025
          %v1077 = vmul.f32 %v1075, %v1026
          %1080 = vrot.lane.b32.xlu0 %v1076, 124
          %v1081 = vpop.permute.xlu0 %1080
          %1082 = vrot.lane.b32.xlu0 %v1077, 124
          %v1083 = vpop.permute.xlu0 %1082
          %v1086 = vadd.f32 %v1072, %v1081
          %v1087 = vadd.f32 %v1073, %v1083
          %s1088 = sld [smem:[#allocation5 + $0x3d]]
          %v1089 = vstv %s1088
          %v1090 = vmul.f32 %v1089, %v1025
          %v1091 = vmul.f32 %v1089, %v1026
          %1094 = vrot.lane.b32.xlu0 %v1090, 123
          %v1095 = vpop.permute.xlu0 %1094
          %1096 = vrot.lane.b32.xlu0 %v1091, 123
          %v1097 = vpop.permute.xlu0 %1096
          %v1100 = vadd.f32 %v1086, %v1095
          %v1101 = vadd.f32 %v1087, %v1097
          %s1102 = sld [smem:[#allocation5 + $0x3e]]
          %v1103 = vstv %s1102
          %v1104 = vmul.f32 %v1103, %v1025
          %v1105 = vmul.f32 %v1103, %v1026
          %1108 = vrot.lane.b32.xlu0 %v1104, 122
          %v1109 = vpop.permute.xlu0 %1108
          %1110 = vrot.lane.b32.xlu0 %v1105, 122
          %v1111 = vpop.permute.xlu0 %1110
          %v1114 = vadd.f32 %v1100, %v1109
          %v1115 = vadd.f32 %v1101, %v1111
          %s1116 = sld [smem:[#allocation5 + $0x3f]]
          %v1117 = vld [vmem:[%s285 + $0x2] sm:$0xff]
          %v1118 = vld [vmem:[%s285 + $0xa] sm:$0xff]
          %v1119 = vstv %s1116
          %v1120 = vmul.f32 %v1119, %v1117
          %v1121 = vmul.f32 %v1119, %v1118
          %v1122 = vadd.f32 %v1114, %v1120
          %v1123 = vadd.f32 %v1115, %v1121
          %s1124 = sld [smem:[#allocation5 + $0x40]]
          %v1125 = vstv %s1124
          %v1126 = vmul.f32 %v1125, %v1117
          %v1127 = vmul.f32 %v1125, %v1118
          %1130 = vrot.lane.b32.xlu0 %v1126, 127
          %v1131 = vpop.permute.xlu0 %1130
          %1132 = vrot.lane.b32.xlu0 %v1127, 127
          %v1133 = vpop.permute.xlu0 %1132
          %v1136 = vadd.f32 %v1122, %v1131
          %v1137 = vadd.f32 %v1123, %v1133
          %s1138 = sld [smem:[#allocation5 + $0x41]]
          %v1139 = vstv %s1138
          %v1140 = vmul.f32 %v1139, %v1117
          %v1141 = vmul.f32 %v1139, %v1118
          %1144 = vrot.lane.b32.xlu0 %v1140, 126
          %v1145 = vpop.permute.xlu0 %1144
          %1146 = vrot.lane.b32.xlu0 %v1141, 126
          %v1147 = vpop.permute.xlu0 %1146
          %v1150 = vadd.f32 %v1136, %v1145
          %v1151 = vadd.f32 %v1137, %v1147
          %s1152 = sld [smem:[#allocation5 + $0x42]]
          %v1153 = vstv %s1152
          %v1154 = vmul.f32 %v1153, %v1117
          %v1155 = vmul.f32 %v1153, %v1118
          %1158 = vrot.lane.b32.xlu0 %v1154, 125
          %v1159 = vpop.permute.xlu0 %1158
          %1160 = vrot.lane.b32.xlu0 %v1155, 125
          %v1161 = vpop.permute.xlu0 %1160
          %v1164 = vadd.f32 %v1150, %v1159
          %v1165 = vadd.f32 %v1151, %v1161
          %s1166 = sld [smem:[#allocation5 + $0x43]]
          %v1167 = vstv %s1166
          %v1168 = vmul.f32 %v1167, %v1117
          %v1169 = vmul.f32 %v1167, %v1118
          %1172 = vrot.lane.b32.xlu0 %v1168, 124
          %v1173 = vpop.permute.xlu0 %1172
          %1174 = vrot.lane.b32.xlu0 %v1169, 124
          %v1175 = vpop.permute.xlu0 %1174
          %v1178 = vadd.f32 %v1164, %v1173
          %v1179 = vadd.f32 %v1165, %v1175
          %s1180 = sld [smem:[#allocation5 + $0x44]]
          %v1181 = vstv %s1180
          %v1182 = vmul.f32 %v1181, %v1117
          %v1183 = vmul.f32 %v1181, %v1118
          %1186 = vrot.lane.b32.xlu0 %v1182, 123
          %v1187 = vpop.permute.xlu0 %1186
          %1188 = vrot.lane.b32.xlu0 %v1183, 123
          %v1189 = vpop.permute.xlu0 %1188
          %v1192 = vadd.f32 %v1178, %v1187
          %v1193 = vadd.f32 %v1179, %v1189
          %s1194 = sld [smem:[#allocation5 + $0x45]]
          %v1195 = vstv %s1194
          %v1196 = vmul.f32 %v1195, %v1117
          %v1197 = vmul.f32 %v1195, %v1118
          %1200 = vrot.lane.b32.xlu0 %v1196, 122
          %v1201 = vpop.permute.xlu0 %1200
          %1202 = vrot.lane.b32.xlu0 %v1197, 122
          %v1203 = vpop.permute.xlu0 %1202
          %v1206 = vadd.f32 %v1192, %v1201
          %v1207 = vadd.f32 %v1193, %v1203
          %s1208 = sld [smem:[#allocation5 + $0x46]]
          %v1209 = vld [vmem:[%s285 + $0x3] sm:$0xff]
          %v1210 = vld [vmem:[%s285 + $0xb] sm:$0xff]
          %v1211 = vstv %s1208
          %v1212 = vmul.f32 %v1211, %v1209
          %v1213 = vmul.f32 %v1211, %v1210
          %v1214 = vadd.f32 %v1206, %v1212
          %v1215 = vadd.f32 %v1207, %v1213
          %s1216 = sld [smem:[#allocation5 + $0x47]]
          %v1217 = vstv %s1216
          %v1218 = vmul.f32 %v1217, %v1209
          %v1219 = vmul.f32 %v1217, %v1210
          %1222 = vrot.lane.b32.xlu0 %v1218, 127
          %v1223 = vpop.permute.xlu0 %1222
          %1224 = vrot.lane.b32.xlu0 %v1219, 127
          %v1225 = vpop.permute.xlu0 %1224
          %v1228 = vadd.f32 %v1214, %v1223
          %v1229 = vadd.f32 %v1215, %v1225
          %s1230 = sld [smem:[#allocation5 + $0x48]]
          %v1231 = vstv %s1230
          %v1232 = vmul.f32 %v1231, %v1209
          %v1233 = vmul.f32 %v1231, %v1210
          %1236 = vrot.lane.b32.xlu0 %v1232, 126
          %v1237 = vpop.permute.xlu0 %1236
          %1238 = vrot.lane.b32.xlu0 %v1233, 126
          %v1239 = vpop.permute.xlu0 %1238
          %v1242 = vadd.f32 %v1228, %v1237
          %v1243 = vadd.f32 %v1229, %v1239
          %s1244 = sld [smem:[#allocation5 + $0x49]]
          %v1245 = vstv %s1244
          %v1246 = vmul.f32 %v1245, %v1209
          %v1247 = vmul.f32 %v1245, %v1210
          %1250 = vrot.lane.b32.xlu0 %v1246, 125
          %v1251 = vpop.permute.xlu0 %1250
          %1252 = vrot.lane.b32.xlu0 %v1247, 125
          %v1253 = vpop.permute.xlu0 %1252
          %v1256 = vadd.f32 %v1242, %v1251
          %v1257 = vadd.f32 %v1243, %v1253
          %s1258 = sld [smem:[#allocation5 + $0x4a]]
          %v1259 = vstv %s1258
          %v1260 = vmul.f32 %v1259, %v1209
          %v1261 = vmul.f32 %v1259, %v1210
          %1264 = vrot.lane.b32.xlu0 %v1260, 124
          %v1265 = vpop.permute.xlu0 %1264
          %1266 = vrot.lane.b32.xlu0 %v1261, 124
          %v1267 = vpop.permute.xlu0 %1266
          %v1270 = vadd.f32 %v1256, %v1265
          %v1271 = vadd.f32 %v1257, %v1267
          %s1272 = sld [smem:[#allocation5 + $0x4b]]
          %v1273 = vstv %s1272
          %v1274 = vmul.f32 %v1273, %v1209
          %v1275 = vmul.f32 %v1273, %v1210
          %1278 = vrot.lane.b32.xlu0 %v1274, 123
          %v1279 = vpop.permute.xlu0 %1278
          %1280 = vrot.lane.b32.xlu0 %v1275, 123
          %v1281 = vpop.permute.xlu0 %1280
          %v1284 = vadd.f32 %v1270, %v1279
          %v1285 = vadd.f32 %v1271, %v1281
          %s1286 = sld [smem:[#allocation5 + $0x4c]]
          %v1287 = vstv %s1286
          %v1288 = vmul.f32 %v1287, %v1209
          %v1289 = vmul.f32 %v1287, %v1210
          %1292 = vrot.lane.b32.xlu0 %v1288, 122
          %v1293 = vpop.permute.xlu0 %1292
          %1294 = vrot.lane.b32.xlu0 %v1289, 122
          %v1295 = vpop.permute.xlu0 %1294
          %v1298 = vadd.f32 %v1284, %v1293
          %v1299 = vadd.f32 %v1285, %v1295
          %s1300 = sld [smem:[#allocation5 + $0x4d]]
          %v1301 = vld [vmem:[%s285 + $0x4] sm:$0xff]
          %v1302 = vld [vmem:[%s285 + $0xc] sm:$0xff]
          %v1303 = vstv %s1300
          %v1304 = vmul.f32 %v1303, %v1301
          %v1305 = vmul.f32 %v1303, %v1302
          %v1306 = vadd.f32 %v1298, %v1304
          %v1307 = vadd.f32 %v1299, %v1305
          %s1308 = sld [smem:[#allocation5 + $0x4e]]
          %v1309 = vstv %s1308
          %v1310 = vmul.f32 %v1309, %v1301
          %v1311 = vmul.f32 %v1309, %v1302
          %1314 = vrot.lane.b32.xlu0 %v1310, 127
          %v1315 = vpop.permute.xlu0 %1314
          %1316 = vrot.lane.b32.xlu0 %v1311, 127
          %v1317 = vpop.permute.xlu0 %1316
          %v1320 = vadd.f32 %v1306, %v1315
          %v1321 = vadd.f32 %v1307, %v1317
          %s1322 = sld [smem:[#allocation5 + $0x4f]]
          %v1323 = vstv %s1322
          %v1324 = vmul.f32 %v1323, %v1301
          %v1325 = vmul.f32 %v1323, %v1302
          %1328 = vrot.lane.b32.xlu0 %v1324, 126
          %v1329 = vpop.permute.xlu0 %1328
          %1330 = vrot.lane.b32.xlu0 %v1325, 126
          %v1331 = vpop.permute.xlu0 %1330
          %v1334 = vadd.f32 %v1320, %v1329
          %v1335 = vadd.f32 %v1321, %v1331
          %s1336 = sld [smem:[#allocation5 + $0x50]]
          %v1337 = vstv %s1336
          %v1338 = vmul.f32 %v1337, %v1301
          %v1339 = vmul.f32 %v1337, %v1302
          %1342 = vrot.lane.b32.xlu0 %v1338, 125
          %v1343 = vpop.permute.xlu0 %1342
          %1344 = vrot.lane.b32.xlu0 %v1339, 125
          %v1345 = vpop.permute.xlu0 %1344
          %v1348 = vadd.f32 %v1334, %v1343
          %v1349 = vadd.f32 %v1335, %v1345
          %s1350 = sld [smem:[#allocation5 + $0x51]]
          %v1351 = vstv %s1350
          %v1352 = vmul.f32 %v1351, %v1301
          %v1353 = vmul.f32 %v1351, %v1302
          %1356 = vrot.lane.b32.xlu0 %v1352, 124
          %v1357 = vpop.permute.xlu0 %1356
          %1358 = vrot.lane.b32.xlu0 %v1353, 124
          %v1359 = vpop.permute.xlu0 %1358
          %v1362 = vadd.f32 %v1348, %v1357
          %v1363 = vadd.f32 %v1349, %v1359
          %s1364 = sld [smem:[#allocation5 + $0x52]]
          %v1365 = vstv %s1364
          %v1366 = vmul.f32 %v1365, %v1301
          %v1367 = vmul.f32 %v1365, %v1302
          %1370 = vrot.lane.b32.xlu0 %v1366, 123
          %v1371 = vpop.permute.xlu0 %1370
          %1372 = vrot.lane.b32.xlu0 %v1367, 123
          %v1373 = vpop.permute.xlu0 %1372
          %v1376 = vadd.f32 %v1362, %v1371
          %v1377 = vadd.f32 %v1363, %v1373
          %s1378 = sld [smem:[#allocation5 + $0x53]]
          %v1379 = vstv %s1378
          %v1380 = vmul.f32 %v1379, %v1301
          %v1381 = vmul.f32 %v1379, %v1302
          %1384 = vrot.lane.b32.xlu0 %v1380, 122
          %v1385 = vpop.permute.xlu0 %1384
          %1386 = vrot.lane.b32.xlu0 %v1381, 122
          %v1387 = vpop.permute.xlu0 %1386
          %v1390 = vadd.f32 %v1376, %v1385
          %v1391 = vadd.f32 %v1377, %v1387
          %s1392 = sld [smem:[#allocation5 + $0x54]]
          %v1393 = vld [vmem:[%s285 + $0x5] sm:$0xff]
          %v1394 = vld [vmem:[%s285 + $0xd] sm:$0xff]
          %v1395 = vstv %s1392
          %v1396 = vmul.f32 %v1395, %v1393
          %v1397 = vmul.f32 %v1395, %v1394
          %v1398 = vadd.f32 %v1390, %v1396
          %v1399 = vadd.f32 %v1391, %v1397
          %s1400 = sld [smem:[#allocation5 + $0x55]]
          %v1401 = vstv %s1400
          %v1402 = vmul.f32 %v1401, %v1393
          %v1403 = vmul.f32 %v1401, %v1394
          %1406 = vrot.lane.b32.xlu0 %v1402, 127
          %v1407 = vpop.permute.xlu0 %1406
          %1408 = vrot.lane.b32.xlu0 %v1403, 127
          %v1409 = vpop.permute.xlu0 %1408
          %v1412 = vadd.f32 %v1398, %v1407
          %v1413 = vadd.f32 %v1399, %v1409
          %s1414 = sld [smem:[#allocation5 + $0x56]]
          %v1415 = vstv %s1414
          %v1416 = vmul.f32 %v1415, %v1393
          %v1417 = vmul.f32 %v1415, %v1394
          %1420 = vrot.lane.b32.xlu0 %v1416, 126
          %v1421 = vpop.permute.xlu0 %1420
          %1422 = vrot.lane.b32.xlu0 %v1417, 126
          %v1423 = vpop.permute.xlu0 %1422
          %v1426 = vadd.f32 %v1412, %v1421
          %v1427 = vadd.f32 %v1413, %v1423
          %s1428 = sld [smem:[#allocation5 + $0x57]]
          %v1429 = vstv %s1428
          %v1430 = vmul.f32 %v1429, %v1393
          %v1431 = vmul.f32 %v1429, %v1394
          %1434 = vrot.lane.b32.xlu0 %v1430, 125
          %v1435 = vpop.permute.xlu0 %1434
          %1436 = vrot.lane.b32.xlu0 %v1431, 125
          %v1437 = vpop.permute.xlu0 %1436
          %v1440 = vadd.f32 %v1426, %v1435
          %v1441 = vadd.f32 %v1427, %v1437
          %s1442 = sld [smem:[#allocation5 + $0x58]]
          %v1443 = vstv %s1442
          %v1444 = vmul.f32 %v1443, %v1393
          %v1445 = vmul.f32 %v1443, %v1394
          %1448 = vrot.lane.b32.xlu0 %v1444, 124
          %v1449 = vpop.permute.xlu0 %1448
          %1450 = vrot.lane.b32.xlu0 %v1445, 124
          %v1451 = vpop.permute.xlu0 %1450
          %v1454 = vadd.f32 %v1440, %v1449
          %v1455 = vadd.f32 %v1441, %v1451
          %s1456 = sld [smem:[#allocation5 + $0x59]]
          %v1457 = vstv %s1456
          %v1458 = vmul.f32 %v1457, %v1393
          %v1459 = vmul.f32 %v1457, %v1394
          %1462 = vrot.lane.b32.xlu0 %v1458, 123
          %v1463 = vpop.permute.xlu0 %1462
          %1464 = vrot.lane.b32.xlu0 %v1459, 123
          %v1465 = vpop.permute.xlu0 %1464
          %v1468 = vadd.f32 %v1454, %v1463
          %v1469 = vadd.f32 %v1455, %v1465
          %s1470 = sld [smem:[#allocation5 + $0x5a]]
          %v1471 = vstv %s1470
          %v1472 = vmul.f32 %v1471, %v1393
          %v1473 = vmul.f32 %v1471, %v1394
          %1476 = vrot.lane.b32.xlu0 %v1472, 122
          %v1477 = vpop.permute.xlu0 %1476
          %1478 = vrot.lane.b32.xlu0 %v1473, 122
          %v1479 = vpop.permute.xlu0 %1478
          %v1482 = vadd.f32 %v1468, %v1477
          %v1483 = vadd.f32 %v1469, %v1479
          %s1484 = sld [smem:[#allocation5 + $0x5b]]
          %v1485 = vld [vmem:[%s285 + $0x6] sm:$0xff]
          %v1486 = vld [vmem:[%s285 + $0xe] sm:$0xff]
          %v1487 = vstv %s1484
          %v1488 = vmul.f32 %v1487, %v1485
          %v1489 = vmul.f32 %v1487, %v1486
          %v1490 = vadd.f32 %v1482, %v1488
          %v1491 = vadd.f32 %v1483, %v1489
          %s1492 = sld [smem:[#allocation5 + $0x5c]]
          %v1493 = vstv %s1492
          %v1494 = vmul.f32 %v1493, %v1485
          %v1495 = vmul.f32 %v1493, %v1486
          %1498 = vrot.lane.b32.xlu0 %v1494, 127
          %v1499 = vpop.permute.xlu0 %1498
          %1500 = vrot.lane.b32.xlu0 %v1495, 127
          %v1501 = vpop.permute.xlu0 %1500
          %v1504 = vadd.f32 %v1490, %v1499
          %v1505 = vadd.f32 %v1491, %v1501
          %s1506 = sld [smem:[#allocation5 + $0x5d]]
          %v1507 = vstv %s1506
          %v1508 = vmul.f32 %v1507, %v1485
          %v1509 = vmul.f32 %v1507, %v1486
          %1512 = vrot.lane.b32.xlu0 %v1508, 126
          %v1513 = vpop.permute.xlu0 %1512
          %1514 = vrot.lane.b32.xlu0 %v1509, 126
          %v1515 = vpop.permute.xlu0 %1514
          %v1518 = vadd.f32 %v1504, %v1513
          %v1519 = vadd.f32 %v1505, %v1515
          %s1520 = sld [smem:[#allocation5 + $0x5e]]
          %v1521 = vstv %s1520
          %v1522 = vmul.f32 %v1521, %v1485
          %v1523 = vmul.f32 %v1521, %v1486
          %1526 = vrot.lane.b32.xlu0 %v1522, 125
          %v1527 = vpop.permute.xlu0 %1526
          %1528 = vrot.lane.b32.xlu0 %v1523, 125
          %v1529 = vpop.permute.xlu0 %1528
          %v1532 = vadd.f32 %v1518, %v1527
          %v1533 = vadd.f32 %v1519, %v1529
          %s1534 = sld [smem:[#allocation5 + $0x5f]]
          %v1535 = vstv %s1534
          %v1536 = vmul.f32 %v1535, %v1485
          %v1537 = vmul.f32 %v1535, %v1486
          %1540 = vrot.lane.b32.xlu0 %v1536, 124
          %v1541 = vpop.permute.xlu0 %1540
          %1542 = vrot.lane.b32.xlu0 %v1537, 124
          %v1543 = vpop.permute.xlu0 %1542
          %v1546 = vadd.f32 %v1532, %v1541
          %v1547 = vadd.f32 %v1533, %v1543
          %s1548 = sld [smem:[#allocation5 + $0x60]]
          %v1549 = vstv %s1548
          %v1550 = vmul.f32 %v1549, %v1485
          %v1551 = vmul.f32 %v1549, %v1486
          %1554 = vrot.lane.b32.xlu0 %v1550, 123
          %v1555 = vpop.permute.xlu0 %1554
          %1556 = vrot.lane.b32.xlu0 %v1551, 123
          %v1557 = vpop.permute.xlu0 %1556
          %v1560 = vadd.f32 %v1546, %v1555
          %v1561 = vadd.f32 %v1547, %v1557
          %s1562 = sld [smem:[#allocation5 + $0x61]]
          %v1563 = vstv %s1562
          %v1564 = vmul.f32 %v1563, %v1485
          %v1565 = vmul.f32 %v1563, %v1486
          %1568 = vrot.lane.b32.xlu0 %v1564, 122
          %v1569 = vpop.permute.xlu0 %1568
          %1570 = vrot.lane.b32.xlu0 %v1565, 122
          %v1571 = vpop.permute.xlu0 %1570
          %v1574 = vadd.f32 %v1560, %v1569
          %v1575 = vadd.f32 %v1561, %v1571
          %v1576 = vxor.u32 %v1574, 2147483648
          %v1577 = vxor.u32 %v1575, 2147483648
          %v1578 = vmul.f32 %v1576, 1.442695
          %v1579 = vpow.pop %v1578
          %v1580 = vmul.f32 %v1577, 1.442695
          %v1581 = vpow.pop %v1580
          %v1582 = vadd.f32 %v1579, 1.0
          %v1583 = vadd.f32 %v1581, 1.0
          %v1584 = vrcp.pop %v1582
          %v1585 = vmul.f32 1.0, %v1584
          %v1586 = vrcp.pop %v1583
          %v1587 = vmul.f32 1.0, %v1586
          %1588 = vst.msk [vmem:[%s190] sm:$0xff] %vm200, %v1585
          %1589 = vst.msk [vmem:[%s190 + $0x8] sm:$0xff] %vm200, %v1587
        $region44: #{tpu_custom_call.1} parent=27 // pred_fallthru
          _
        %s1590 = sand.u32 %s89, 1
        %s1591 = scalar_lea.sflag [#allocation7], %s1590
        %s1592 = sand.u32 %s89, 1
        %s1593 = smul.addr %s1592, 16
        %s1594 = scalar_lea.vmem [#allocation10], %s1593
        // Predicated region
        $region45: #{tpu_custom_call.1} parent=27 // pred_check
          %p1595 = pneg %p99
        $region46: #{tpu_custom_call.1} parent=27 // pred_check_branch
          %1597 = sbr.rel (%p1595) target = $region48
        $region47: #{tpu_custom_call.1} parent=27 // pred_region
          %s1599 = ssub.s32 256, 256
          %1600 = vsyncadd %s1591, %s1599
          %s1601 = smul.addr %s24, 2
          %s1602 = smul.addr %s1601, 128
          %s1603 = scalar_lea.hbm %s2, %s1602
          %s1604 = sshll.u32 %s1594, 4
          %s1605 = int_to_ptr.vmem [resolvable:$true] %s1604
          %1610 = dma.vmem_to_hbm [thread:$0]  %s1605, 256, %s1603, %s1591, 128, 128, 8
        $region48: #{tpu_custom_call.1} parent=27 // pred_fallthru
          _
      $region28: #{tpu_custom_call.1} parent=5 // pred_fallthru
        _
      %p1611 = scmp.le.s32.totalorder 2, %s15
      // Predicated region
      $region49: #{tpu_custom_call.1} parent=5 // pred_check
        %p1612 = pneg %p1611
      $region50: #{tpu_custom_call.1} parent=5 // pred_check_branch
        %1614 = sbr.rel (%p1612) target = $region52
      $region51: #{tpu_custom_call.1} parent=5 // pred_region
        %s1615 = ssub.s32 %s15, 2
        // Predicated region
        $region53: #{tpu_custom_call.1} parent=51 // pred_check
          %p1616 = pneg %p105
        $region54: #{tpu_custom_call.1} parent=51 // pred_check_branch
          %1618 = sbr.rel (%p1616) target = $region56
        $region55: #{tpu_custom_call.1} parent=51 // pred_region
          %s1619 = sand.u32 %s90, 1
          %s1620 = scalar_lea.sflag [#allocation7], %s1619
          %s1621 = sand.u32 %s90, 1
          %s1622 = smul.addr %s1621, 16
          %s1623 = scalar_lea.vmem [#allocation10], %s1622
          %1624 = dma.done %s1620, 256
        $region56: #{tpu_custom_call.1} parent=51 // pred_fallthru
          _
      $region52: #{tpu_custom_call.1} parent=5 // pred_fallthru
        _
    $region6: #{tpu_custom_call.1} parent=1 // loop_footer
      %s19 = sadd.s32 1, %s15
    $region7: #{tpu_custom_call.1} parent=1 // loop_footer_branch
      %14 = sbr.rel target = $region3
    $region8: #{tpu_custom_call.1} parent=1 // loop_exit
      _
    %1625 = vsyncpa [#allocation6], 1
    %s1626 = scalar_lea.sflag [#allocation6], 1
    %1627 = vsyncpa %s1626, 1
    %1628 = vsyncpa [#allocation7], 1
    %s1629 = scalar_lea.sflag [#allocation7], 1
    %1630 = vsyncpa %s1629, 1
    %1631 = vsyncpa [#allocation8], 1
    %s1632 = scalar_lea.sflag [#allocation8], 1
    %1633 = vsyncpa %s1632, 1

</llo_original>
